<compile_context>
chip_gen: v7x
topology: tpu7x:2x2x1
jax: 0.10.0
libtpu: 0.0.40
codegen_flags: <defaults>
</compile_context>

<pallas_src>
import functools

import jax
import jax.numpy as jnp
from jax.experimental import pallas as pl
from jax.experimental.pallas import tpu as pltpu


# ----------------------------------------------------------------------------
# Fused kernel: projections + flash multi-head attention + output projection
# ----------------------------------------------------------------------------
def _fused_flash_self_attention_kernel(
    x_ref, kv_ref, wq_ref, wk_ref, wv_ref, wo_ref, bo_ref,   # inputs
    o_ref,                                                    # output
    q_scr, m_scr, l_scr, acc_scr, merged_scr,                 # VMEM scratch
    *, heads, dim_heads,
):
    ki = pl.program_id(2)
    nk = pl.num_programs(2)
    cdt = wq_ref.dtype          # MXU compute dtype (bf16 by default)
    e = dim_heads

    def split_heads(z):
        # (rows, heads*e) -> (heads, rows, e). One relayout per tile; after
        # this every matmul is a head-batched dot_general (no per-matmul
        # lane slicing, no unrolled head loop of tiny matmuls).
        return jnp.stack([z[:, h * e:(h + 1) * e] for h in range(heads)], axis=0)

    # --- once per (batch, q-tile): Q projection + online-softmax state init --
    @pl.when(ki == 0)
    def _init():
        x = x_ref[0].astype(cdt)                                    # (tq, d)
        q = jnp.dot(x, wq_ref[...], preferred_element_type=jnp.float32)
        q_scr[...] = split_heads(q.astype(cdt))                     # (h, tq, e)
        m_scr[...] = jnp.full(m_scr.shape, -jnp.inf, jnp.float32)
        l_scr[...] = jnp.zeros(l_scr.shape, jnp.float32)
        acc_scr[...] = jnp.zeros(acc_scr.shape, jnp.float32)

    # --- per kv tile: K/V projections + online-softmax update ---------------
    ctx_in = kv_ref[0].astype(cdt)                                  # (tk, d)
    k = jnp.dot(ctx_in, wk_ref[...], preferred_element_type=jnp.float32)
    v = jnp.dot(ctx_in, wv_ref[...], preferred_element_type=jnp.float32)
    k_h = split_heads(k.astype(cdt))                                # (h, tk, e)
    v_h = split_heads(v.astype(cdt))                                # (h, tk, e)

    q_h = q_scr[...]                                                # (h, tq, e)
    # Head-batched scores (scale 1/sqrt(e) already folded into W_q).
    s = jnp.einsum("hqe,hke->hqk", q_h, k_h,
                   preferred_element_type=jnp.float32)              # (h, tq, tk)

    m_prev = m_scr[...]                                             # (h, tq, 1)
    m_new = jnp.maximum(m_prev, jnp.max(s, axis=-1, keepdims=True))
    alpha = jnp.exp(m_prev - m_new)
    p = jnp.exp(s - m_new)                                          # f32
    l_scr[...] = alpha * l_scr[...] + jnp.sum(p, axis=-1, keepdims=True)
    pv = jnp.einsum("hqk,hke->hqe", p.astype(cdt), v_h,
                    preferred_element_type=jnp.float32)             # (h, tq, e)
    acc_scr[...] = alpha * acc_scr[...] + pv
    m_scr[...] = m_new

    # --- once per (batch, q-tile): merge heads + single output projection ---
    @pl.when(ki == nk - 1)
    def _finalize():
        ctx = acc_scr[...] * pl.reciprocal(l_scr[...], approx=True)  # (h,tq,e)
        # Write each head's context into its static lane slice of ONE buffer,
        # then one (tq, dh) @ (dh, d) projection (contraction dim = dh).
        for h in range(heads):
            merged_scr[:, h * e:(h + 1) * e] = ctx[h].astype(cdt)
        out = jnp.dot(merged_scr[...], wo_ref[...],
                      preferred_element_type=jnp.float32)            # (tq, d)
        o_ref[0] = (out + bo_ref[...]).astype(o_ref.dtype)


# ----------------------------------------------------------------------------
# Parameters (PyTorch nn.Linear convention: W is (out_features, in_features))
# ----------------------------------------------------------------------------
def init_params(key, dim, heads, dim_heads=None, dtype=jnp.float32):
    dim_heads = dim // heads if dim_heads is None else dim_heads
    dim_hidden = dim_heads * heads
    k1, k2, k3, k4 = jax.random.split(key, 4)
    s = 0.05
    return {
        "wq": (s * jax.random.normal(k1, (dim_hidden, dim))).astype(dtype),
        "wkv": (s * jax.random.normal(k2, (2 * dim_hidden, dim))).astype(dtype),
        "wo": (s * jax.random.normal(k3, (dim, dim_hidden))).astype(dtype),
        "bo": (s * jax.random.normal(k4, (dim,))).astype(dtype),
        "heads": heads,
        "dim_heads": dim_heads,
    }


def prepare_params(params, compute_dtype=jnp.bfloat16):
    """One-time kernel weight prep: transpose, fold 1/sqrt(e) into W_q, cast
    MXU operands to bf16 (f32 accumulation happens inside the kernel)."""
    heads, e = params["heads"], params["dim_heads"]
    dh = heads * e
    scale = float(e) ** -0.5
    return {
        "wq_t": (params["wq"].astype(jnp.float32) * scale).T.astype(compute_dtype),
        "wk_t": params["wkv"][:dh].T.astype(compute_dtype),
        "wv_t": params["wkv"][dh:].T.astype(compute_dtype),
        "wo_t": params["wo"].T.astype(compute_dtype),
        "bo": params["bo"].reshape(1, -1).astype(jnp.float32),
        "heads": heads,
        "dim_heads": e,
    }


# ----------------------------------------------------------------------------
# Forward pass
# ----------------------------------------------------------------------------
def _pick_block(n, target):
    """Largest multiple of 8 that divides n and is <= target (else n itself)."""
    if n <= target or n % 8 != 0:
        return n
    best, m = 8, 8
    while m <= target:
        if n % m == 0:
            best = m
        m += 8
    return best


def self_attention_forward(prep, x, kv=None, *, block_q=128, block_kv=256):
    kv_in = x if kv is None else kv   # self-attention: same HBM buffer, no copy
    heads, e = prep["heads"], prep["dim_heads"]
    dh = heads * e
    b, t, d = x.shape
    _, t_kv, _ = kv_in.shape
    cdt = prep["wq_t"].dtype

    tq = _pick_block(t, block_q)
    tk = _pick_block(t_kv, block_kv)
    grid = (b, t // tq, t_kv // tk)

    kernel = functools.partial(
        _fused_flash_self_attention_kernel, heads=heads, dim_heads=e
    )

    return pl.pallas_call(
        kernel,
        out_shape=jax.ShapeDtypeStruct((b, t, d), x.dtype),
        grid=grid,
        in_specs=[
            pl.BlockSpec((1, tq, d), lambda bi, qi, ki: (bi, qi, 0)),   # x (q rows)
            pl.BlockSpec((1, tk, d), lambda bi, qi, ki: (bi, ki, 0)),   # kv rows
            pl.BlockSpec((d, dh), lambda bi, qi, ki: (0, 0)),           # Wq^T (scaled)
            pl.BlockSpec((d, dh), lambda bi, qi, ki: (0, 0)),           # Wk^T
            pl.BlockSpec((d, dh), lambda bi, qi, ki: (0, 0)),           # Wv^T
            pl.BlockSpec((dh, d), lambda bi, qi, ki: (0, 0)),           # Wo^T
            pl.BlockSpec((1, d), lambda bi, qi, ki: (0, 0)),            # b_o
        ],
        out_specs=pl.BlockSpec((1, tq, d), lambda bi, qi, ki: (bi, qi, 0)),
        scratch_shapes=[
            pltpu.VMEM((heads, tq, e), cdt),          # cached Q per q-tile
            pltpu.VMEM((heads, tq, 1), jnp.float32),  # online-softmax m
            pltpu.VMEM((heads, tq, 1), jnp.float32),  # online-softmax l
            pltpu.VMEM((heads, tq, e), jnp.float32),  # attention accumulator
            pltpu.VMEM((tq, dh), cdt),                # merged-heads context
        ],
        compiler_params=pltpu.CompilerParams(
            dimension_semantics=("parallel", "parallel", "arbitrary"),
            vmem_limit_bytes=48 * 1024 * 1024,  # fits v7x 64 MiB; lifts v5e/v6e defaults
        ),
    )(x, kv_in, prep["wq_t"], prep["wk_t"], prep["wv_t"], prep["wo_t"], prep["bo"])


# ----------------------------------------------------------------------------
# Pure-JAX f32 reference (for numeric verification)
# ----------------------------------------------------------------------------
def self_attention_ref(params, x, kv=None):
    kv = x if kv is None else kv
    heads, e = params["heads"], params["dim_heads"]
    b, t, _ = x.shape
    q = x @ params["wq"].T
    kvp = kv @ params["wkv"].T
    dh = heads * e
    k, v = kvp[..., :dh], kvp[..., dh:]

    def mh(z):
        return z.reshape(b, -1, heads, e).transpose(0, 2, 1, 3).reshape(b * heads, -1, e)

    q, k, v = map(mh, (q, k, v))
    dots = jnp.einsum("bie,bje->bij", q, k) * e ** (-0.5)
    dots = jax.nn.softmax(dots, axis=-1)
    out = jnp.einsum("bij,bje->bie", dots, v)
    out = out.reshape(b, heads, -1, e).transpose(0, 2, 1, 3).reshape(b, -1, dh)
    return out @ params["wo"].T + params["bo"]


if __name__ == "__main__":
    key = jax.random.PRNGKey(0)
    kx, kp = jax.random.split(key)

    batch, seq, dim, heads = 2, 16, 32, 4   # dim_heads = 8, dim_hidden = 32
    x = jax.random.normal(kx, (batch, seq, dim), dtype=jnp.float32)

    params = init_params(kp, dim, heads)
    prep = prepare_params(params)           # one-time weight prep

    # block_q = block_kv = 8 -> grid (2, 2, 2): exercises the online-softmax
    # kv reduction and gives >=2 parallel grid points.
    out = self_attention_forward(prep, x, block_q=8, block_kv=8)
    out = jax.block_until_ready(out)

    ref = self_attention_ref(params, x)
    assert out.shape == (batch, seq, dim)
    max_err = float(jnp.max(jnp.abs(out.astype(jnp.float32) - ref)))
    # bf16 MXU operands + approx reciprocal => loosened tolerance vs f32 ref.
    assert jnp.allclose(out, ref, atol=2e-2, rtol=2e-2), max_err

    print("KERNEL_OK")
</pallas_src>

<mosaic_0001>
module attributes {stable_mosaic.version = 11 : i64} {
  func.func @_fused_flash_self_attention_kernel(%arg0: i32, %arg1: i32, %arg2: i32, %arg3: memref<1x8x32xf32, #tpu.memory_space<vmem>>, %arg4: memref<1x8x32xf32, #tpu.memory_space<vmem>>, %arg5: memref<32x32xbf16, #tpu.memory_space<vmem>>, %arg6: memref<32x32xbf16, #tpu.memory_space<vmem>>, %arg7: memref<32x32xbf16, #tpu.memory_space<vmem>>, %arg8: memref<32x32xbf16, #tpu.memory_space<vmem>>, %arg9: memref<1x32xf32, #tpu.memory_space<vmem>>, %arg10: memref<1x8x32xf32, #tpu.memory_space<vmem>>, %arg11: memref<4x8x8xbf16, #tpu.memory_space<vmem>>, %arg12: memref<4x8x1xf32, #tpu.memory_space<vmem>>, %arg13: memref<4x8x1xf32, #tpu.memory_space<vmem>>, %arg14: memref<4x8x8xf32, #tpu.memory_space<vmem>>, %arg15: memref<8x32xbf16, #tpu.memory_space<vmem>>) attributes {dimension_semantics = [#tpu.dimension_semantics<parallel>, #tpu.dimension_semantics<parallel>, #tpu.dimension_semantics<arbitrary>], iteration_bounds = array<i64: 2, 2, 2>, scalar_prefetch = 0 : i64, scratch_operands = 5 : i64, tpu.core_type = #tpu.core_type<tc>, window_params = [{transform_indices = @transform_0, window_bounds = array<i64: 1, 8, 32>}, {transform_indices = @transform_1, window_bounds = array<i64: 1, 8, 32>}, {pipeline_mode = #tpu.pipeline_mode<synchronous>, transform_indices = @transform_2, window_bounds = array<i64: 32, 32>}, {pipeline_mode = #tpu.pipeline_mode<synchronous>, transform_indices = @transform_3, window_bounds = array<i64: 32, 32>}, {pipeline_mode = #tpu.pipeline_mode<synchronous>, transform_indices = @transform_4, window_bounds = array<i64: 32, 32>}, {pipeline_mode = #tpu.pipeline_mode<synchronous>, transform_indices = @transform_5, window_bounds = array<i64: 32, 32>}, {pipeline_mode = #tpu.pipeline_mode<synchronous>, transform_indices = @transform_6, window_bounds = array<i64: 1, 32>}, {transform_indices = @transform_7, window_bounds = array<i64: 1, 8, 32>}]} {
    %c0_i32 = arith.constant 0 : i32
    %0 = arith.cmpi eq, %arg2, %c0_i32 : i32
    %1 = arith.extui %0 : i1 to i32
    %c0_i32_0 = arith.constant 0 : i32
    %2 = arith.cmpi ne, %1, %c0_i32_0 : i32
    scf.if %2 {
      %c0_34 = arith.constant 0 : index
      %c0_35 = arith.constant 0 : index
      %c0_36 = arith.constant 0 : index
      %58 = vector.load %arg3[%c0_34, %c0_35, %c0_36] : memref<1x8x32xf32, #tpu.memory_space<vmem>>, vector<1x8x32xf32>
      %59 = vector.shape_cast %58 : vector<1x8x32xf32> to vector<8x32xf32>
      %60 = arith.truncf %59 : vector<8x32xf32> to vector<8x32xbf16>
      %c0_37 = arith.constant 0 : index
      %c0_38 = arith.constant 0 : index
      %61 = vector.load %arg5[%c0_37, %c0_38] : memref<32x32xbf16, #tpu.memory_space<vmem>>, vector<32x32xbf16>
      %cst_39 = arith.constant dense<0.000000e+00> : vector<8x32xf32>
      %62 = tpu.matmul %60, %61, %cst_39 {dimension_numbers = #tpu.dot_dimension_numbers<[1], [0], [0], [1], [0, 0, 1, 1], [], []>} : vector<8x32xbf16>, vector<32x32xbf16>, vector<8x32xf32> -> vector<8x32xf32>
      %63 = arith.truncf %62 : vector<8x32xf32> to vector<8x32xbf16>
      %64 = vector.extract_strided_slice %63 {offsets = [0, 0], sizes = [8, 8], strides = [1, 1]} : vector<8x32xbf16> to vector<8x8xbf16>
      %65 = vector.extract_strided_slice %63 {offsets = [0, 8], sizes = [8, 8], strides = [1, 1]} : vector<8x32xbf16> to vector<8x8xbf16>
      %66 = vector.extract_strided_slice %63 {offsets = [0, 16], sizes = [8, 8], strides = [1, 1]} : vector<8x32xbf16> to vector<8x8xbf16>
      %67 = vector.extract_strided_slice %63 {offsets = [0, 24], sizes = [8, 8], strides = [1, 1]} : vector<8x32xbf16> to vector<8x8xbf16>
      %68 = vector.shape_cast %64 : vector<8x8xbf16> to vector<1x8x8xbf16>
      %69 = vector.shape_cast %65 : vector<8x8xbf16> to vector<1x8x8xbf16>
      %70 = vector.shape_cast %66 : vector<8x8xbf16> to vector<1x8x8xbf16>
      %71 = vector.shape_cast %67 : vector<8x8xbf16> to vector<1x8x8xbf16>
      %72 = tpu.concatenate %68, %69, %70, %71 in 0 : vector<1x8x8xbf16>, vector<1x8x8xbf16>, vector<1x8x8xbf16>, vector<1x8x8xbf16> -> vector<4x8x8xbf16>
      %c0_40 = arith.constant 0 : index
      %c0_41 = arith.constant 0 : index
      %c0_42 = arith.constant 0 : index
      %73 = vector.load %arg11[%c0_40, %c0_41, %c0_42] : memref<4x8x8xbf16, #tpu.memory_space<vmem>>, vector<4x8x8xbf16>
      tpu.vector_store %arg11[%c0_40, %c0_41, %c0_42], %72 {strides = array<i32>} : memref<4x8x8xbf16, #tpu.memory_space<vmem>>, vector<4x8x8xbf16>,
      %cst_43 = arith.constant 0xFF800000 : f32
      %74 = vector.broadcast %cst_43 : f32 to vector<4x8x1xf32>
      %c0_44 = arith.constant 0 : index
      %c0_45 = arith.constant 0 : index
      %c0_46 = arith.constant 0 : index
      %75 = vector.load %arg12[%c0_44, %c0_45, %c0_46] : memref<4x8x1xf32, #tpu.memory_space<vmem>>, vector<4x8x1xf32>
      tpu.vector_store %arg12[%c0_44, %c0_45, %c0_46], %74 {strides = array<i32>} : memref<4x8x1xf32, #tpu.memory_space<vmem>>, vector<4x8x1xf32>,
      %cst_47 = arith.constant 0.000000e+00 : f32
      %76 = vector.broadcast %cst_47 : f32 to vector<4x8x1xf32>
      %c0_48 = arith.constant 0 : index
      %c0_49 = arith.constant 0 : index
      %c0_50 = arith.constant 0 : index
      %77 = vector.load %arg13[%c0_48, %c0_49, %c0_50] : memref<4x8x1xf32, #tpu.memory_space<vmem>>, vector<4x8x1xf32>
      tpu.vector_store %arg13[%c0_48, %c0_49, %c0_50], %76 {strides = array<i32>} : memref<4x8x1xf32, #tpu.memory_space<vmem>>, vector<4x8x1xf32>,
      %cst_51 = arith.constant 0.000000e+00 : f32
      %78 = vector.broadcast %cst_51 : f32 to vector<4x8x8xf32>
      %c0_52 = arith.constant 0 : index
      %c0_53 = arith.constant 0 : index
      %c0_54 = arith.constant 0 : index
      %79 = vector.load %arg14[%c0_52, %c0_53, %c0_54] : memref<4x8x8xf32, #tpu.memory_space<vmem>>, vector<4x8x8xf32>
      tpu.vector_store %arg14[%c0_52, %c0_53, %c0_54], %78 {strides = array<i32>} : memref<4x8x8xf32, #tpu.memory_space<vmem>>, vector<4x8x8xf32>,
    } else {
    }
    %c0 = arith.constant 0 : index
    %c0_1 = arith.constant 0 : index
    %c0_2 = arith.constant 0 : index
    %3 = vector.load %arg4[%c0, %c0_1, %c0_2] : memref<1x8x32xf32, #tpu.memory_space<vmem>>, vector<1x8x32xf32>
    %4 = vector.shape_cast %3 : vector<1x8x32xf32> to vector<8x32xf32>
    %5 = arith.truncf %4 : vector<8x32xf32> to vector<8x32xbf16>
    %c0_3 = arith.constant 0 : index
    %c0_4 = arith.constant 0 : index
    %6 = vector.load %arg6[%c0_3, %c0_4] : memref<32x32xbf16, #tpu.memory_space<vmem>>, vector<32x32xbf16>
    %cst = arith.constant dense<0.000000e+00> : vector<8x32xf32>
    %7 = tpu.matmul %5, %6, %cst {dimension_numbers = #tpu.dot_dimension_numbers<[1], [0], [0], [1], [0, 0, 1, 1], [], []>} : vector<8x32xbf16>, vector<32x32xbf16>, vector<8x32xf32> -> vector<8x32xf32>
    %c0_5 = arith.constant 0 : index
    %c0_6 = arith.constant 0 : index
    %8 = vector.load %arg7[%c0_5, %c0_6] : memref<32x32xbf16, #tpu.memory_space<vmem>>, vector<32x32xbf16>
    %cst_7 = arith.constant dense<0.000000e+00> : vector<8x32xf32>
    %9 = tpu.matmul %5, %8, %cst_7 {dimension_numbers = #tpu.dot_dimension_numbers<[1], [0], [0], [1], [0, 0, 1, 1], [], []>} : vector<8x32xbf16>, vector<32x32xbf16>, vector<8x32xf32> -> vector<8x32xf32>
    %10 = arith.truncf %7 : vector<8x32xf32> to vector<8x32xbf16>
    %11 = vector.extract_strided_slice %10 {offsets = [0, 0], sizes = [8, 8], strides = [1, 1]} : vector<8x32xbf16> to vector<8x8xbf16>
    %12 = vector.extract_strided_slice %10 {offsets = [0, 8], sizes = [8, 8], strides = [1, 1]} : vector<8x32xbf16> to vector<8x8xbf16>
    %13 = vector.extract_strided_slice %10 {offsets = [0, 16], sizes = [8, 8], strides = [1, 1]} : vector<8x32xbf16> to vector<8x8xbf16>
    %14 = vector.extract_strided_slice %10 {offsets = [0, 24], sizes = [8, 8], strides = [1, 1]} : vector<8x32xbf16> to vector<8x8xbf16>
    %15 = vector.shape_cast %11 : vector<8x8xbf16> to vector<1x8x8xbf16>
    %16 = vector.shape_cast %12 : vector<8x8xbf16> to vector<1x8x8xbf16>
    %17 = vector.shape_cast %13 : vector<8x8xbf16> to vector<1x8x8xbf16>
    %18 = vector.shape_cast %14 : vector<8x8xbf16> to vector<1x8x8xbf16>
    %19 = tpu.concatenate %15, %16, %17, %18 in 0 : vector<1x8x8xbf16>, vector<1x8x8xbf16>, vector<1x8x8xbf16>, vector<1x8x8xbf16> -> vector<4x8x8xbf16>
    %20 = arith.truncf %9 : vector<8x32xf32> to vector<8x32xbf16>
    %21 = vector.extract_strided_slice %20 {offsets = [0, 0], sizes = [8, 8], strides = [1, 1]} : vector<8x32xbf16> to vector<8x8xbf16>
    %22 = vector.extract_strided_slice %20 {offsets = [0, 8], sizes = [8, 8], strides = [1, 1]} : vector<8x32xbf16> to vector<8x8xbf16>
    %23 = vector.extract_strided_slice %20 {offsets = [0, 16], sizes = [8, 8], strides = [1, 1]} : vector<8x32xbf16> to vector<8x8xbf16>
    %24 = vector.extract_strided_slice %20 {offsets = [0, 24], sizes = [8, 8], strides = [1, 1]} : vector<8x32xbf16> to vector<8x8xbf16>
    %25 = vector.shape_cast %21 : vector<8x8xbf16> to vector<1x8x8xbf16>
    %26 = vector.shape_cast %22 : vector<8x8xbf16> to vector<1x8x8xbf16>
    %27 = vector.shape_cast %23 : vector<8x8xbf16> to vector<1x8x8xbf16>
    %28 = vector.shape_cast %24 : vector<8x8xbf16> to vector<1x8x8xbf16>
    %29 = tpu.concatenate %25, %26, %27, %28 in 0 : vector<1x8x8xbf16>, vector<1x8x8xbf16>, vector<1x8x8xbf16>, vector<1x8x8xbf16> -> vector<4x8x8xbf16>
    %c0_8 = arith.constant 0 : index
    %c0_9 = arith.constant 0 : index
    %c0_10 = arith.constant 0 : index
    %30 = vector.load %arg11[%c0_8, %c0_9, %c0_10] : memref<4x8x8xbf16, #tpu.memory_space<vmem>>, vector<4x8x8xbf16>
    "tpu.trace_start"() <{level = 10 : i32, message = "hqe,hke->hqk"}> : () -> ()
    %cst_11 = arith.constant dense<0.000000e+00> : vector<4x8x8xf32>
    %31 = tpu.matmul %30, %19, %cst_11 {dimension_numbers = #tpu.dot_dimension_numbers<[2], [2], [1], [1], [0, 0, 0, 1, 1, 1], [0], [0]>} : vector<4x8x8xbf16>, vector<4x8x8xbf16>, vector<4x8x8xf32> -> vector<4x8x8xf32>
    "tpu.trace_stop"() : () -> ()
    %c0_12 = arith.constant 0 : index
    %c0_13 = arith.constant 0 : index
    %c0_14 = arith.constant 0 : index
    %32 = vector.load %arg12[%c0_12, %c0_13, %c0_14] : memref<4x8x1xf32, #tpu.memory_space<vmem>>, vector<4x8x1xf32>
    %cst_15 = arith.constant dense<0xFF800000> : vector<4x8xf32>
    %33 = vector.multi_reduction <maximumf>, %31, %cst_15 [2] : vector<4x8x8xf32> to vector<4x8xf32>
    %34 = vector.shape_cast %33 : vector<4x8xf32> to vector<4x8x1xf32>
    %35 = arith.maximumf %32, %34 : vector<4x8x1xf32>
    %36 = arith.subf %32, %35 : vector<4x8x1xf32>
    %37 = math.exp %36 : vector<4x8x1xf32>
    %38 = vector.broadcast %35 : vector<4x8x1xf32> to vector<4x8x8xf32>
    %39 = arith.subf %31, %38 : vector<4x8x8xf32>
    %40 = math.exp %39 : vector<4x8x8xf32>
    %c0_16 = arith.constant 0 : index
    %c0_17 = arith.constant 0 : index
    %c0_18 = arith.constant 0 : index
    %41 = vector.load %arg13[%c0_16, %c0_17, %c0_18] : memref<4x8x1xf32, #tpu.memory_space<vmem>>, vector<4x8x1xf32>
    %42 = arith.mulf %37, %41 : vector<4x8x1xf32>
    %cst_19 = arith.constant dense<0.000000e+00> : vector<4x8xf32>
    %43 = vector.multi_reduction <add>, %40, %cst_19 [2] : vector<4x8x8xf32> to vector<4x8xf32>
    %44 = vector.shape_cast %43 : vector<4x8xf32> to vector<4x8x1xf32>
    %45 = arith.addf %42, %44 : vector<4x8x1xf32>
    %c0_20 = arith.constant 0 : index
    %c0_21 = arith.constant 0 : index
    %c0_22 = arith.constant 0 : index
    %46 = vector.load %arg13[%c0_20, %c0_21, %c0_22] : memref<4x8x1xf32, #tpu.memory_space<vmem>>, vector<4x8x1xf32>
    tpu.vector_store %arg13[%c0_20, %c0_21, %c0_22], %45 {strides = array<i32>} : memref<4x8x1xf32, #tpu.memory_space<vmem>>, vector<4x8x1xf32>,
    %47 = arith.truncf %40 : vector<4x8x8xf32> to vector<4x8x8xbf16>
    "tpu.trace_start"() <{level = 10 : i32, message = "hqk,hke->hqe"}> : () -> ()
    %cst_23 = arith.constant dense<0.000000e+00> : vector<4x8x8xf32>
    %48 = tpu.matmul %47, %29, %cst_23 {dimension_numbers = #tpu.dot_dimension_numbers<[2], [1], [1], [2], [0, 0, 0, 1, 1, 2], [0], [0]>} : vector<4x8x8xbf16>, vector<4x8x8xbf16>, vector<4x8x8xf32> -> vector<4x8x8xf32>
    "tpu.trace_stop"() : () -> ()
    %c0_24 = arith.constant 0 : index
    %c0_25 = arith.constant 0 : index
    %c0_26 = arith.constant 0 : index
    %49 = vector.load %arg14[%c0_24, %c0_25, %c0_26] : memref<4x8x8xf32, #tpu.memory_space<vmem>>, vector<4x8x8xf32>
    %50 = vector.broadcast %37 : vector<4x8x1xf32> to vector<4x8x8xf32>
    %51 = arith.mulf %50, %49 : vector<4x8x8xf32>
    %52 = arith.addf %51, %48 : vector<4x8x8xf32>
    %c0_27 = arith.constant 0 : index
    %c0_28 = arith.constant 0 : index
    %c0_29 = arith.constant 0 : index
    %53 = vector.load %arg14[%c0_27, %c0_28, %c0_29] : memref<4x8x8xf32, #tpu.memory_space<vmem>>, vector<4x8x8xf32>
    tpu.vector_store %arg14[%c0_27, %c0_28, %c0_29], %52 {strides = array<i32>} : memref<4x8x8xf32, #tpu.memory_space<vmem>>, vector<4x8x8xf32>,
    %c0_30 = arith.constant 0 : index
    %c0_31 = arith.constant 0 : index
    %c0_32 = arith.constant 0 : index
    %54 = vector.load %arg12[%c0_30, %c0_31, %c0_32] : memref<4x8x1xf32, #tpu.memory_space<vmem>>, vector<4x8x1xf32>
    tpu.vector_store %arg12[%c0_30, %c0_31, %c0_32], %35 {strides = array<i32>} : memref<4x8x1xf32, #tpu.memory_space<vmem>>, vector<4x8x1xf32>,
    %c1_i32 = arith.constant 1 : i32
    %55 = arith.cmpi eq, %arg2, %c1_i32 : i32
    %56 = arith.extui %55 : i1 to i32
    %c0_i32_33 = arith.constant 0 : i32
    %57 = arith.cmpi ne, %56, %c0_i32_33 : i32
    scf.if %57 {
      %c0_34 = arith.constant 0 : index
      %c0_35 = arith.constant 0 : index
      %c0_36 = arith.constant 0 : index
      %58 = vector.load %arg14[%c0_34, %c0_35, %c0_36] : memref<4x8x8xf32, #tpu.memory_space<vmem>>, vector<4x8x8xf32>
      %c0_37 = arith.constant 0 : index
      %c0_38 = arith.constant 0 : index
      %c0_39 = arith.constant 0 : index
      %59 = vector.load %arg13[%c0_37, %c0_38, %c0_39] : memref<4x8x1xf32, #tpu.memory_space<vmem>>, vector<4x8x1xf32>
      %60 = tpu.reciprocal %59 {approx = true} : vector<4x8x1xf32> -> vector<4x8x1xf32>
      %61 = vector.broadcast %60 : vector<4x8x1xf32> to vector<4x8x8xf32>
      %62 = arith.mulf %58, %61 : vector<4x8x8xf32>
      %63 = vector.extract_strided_slice %62 {offsets = [0, 0, 0], sizes = [1, 8, 8], strides = [1, 1, 1]} : vector<4x8x8xf32> to vector<1x8x8xf32>
      %64 = vector.shape_cast %63 : vector<1x8x8xf32> to vector<8x8xf32>
      %65 = arith.truncf %64 : vector<8x8xf32> to vector<8x8xbf16>
      %c0_40 = arith.constant 0 : index
      %c0_41 = arith.constant 0 : index
      %66 = vector.load %arg15[%c0_40, %c0_41] : memref<8x32xbf16, #tpu.memory_space<vmem>>, vector<8x8xbf16>
      tpu.vector_store %arg15[%c0_40, %c0_41], %65 {strides = array<i32>} : memref<8x32xbf16, #tpu.memory_space<vmem>>, vector<8x8xbf16>,
      %67 = vector.extract_strided_slice %62 {offsets = [1, 0, 0], sizes = [1, 8, 8], strides = [1, 1, 1]} : vector<4x8x8xf32> to vector<1x8x8xf32>
      %68 = vector.shape_cast %67 : vector<1x8x8xf32> to vector<8x8xf32>
      %69 = arith.truncf %68 : vector<8x8xf32> to vector<8x8xbf16>
      %c0_42 = arith.constant 0 : index
      %c8 = arith.constant 8 : index
      %70 = vector.load %arg15[%c0_42, %c8] : memref<8x32xbf16, #tpu.memory_space<vmem>>, vector<8x8xbf16>
      tpu.vector_store %arg15[%c0_42, %c8], %69 {strides = array<i32>} : memref<8x32xbf16, #tpu.memory_space<vmem>>, vector<8x8xbf16>,
      %71 = vector.extract_strided_slice %62 {offsets = [2, 0, 0], sizes = [1, 8, 8], strides = [1, 1, 1]} : vector<4x8x8xf32> to vector<1x8x8xf32>
      %72 = vector.shape_cast %71 : vector<1x8x8xf32> to vector<8x8xf32>
      %73 = arith.truncf %72 : vector<8x8xf32> to vector<8x8xbf16>
      %c0_43 = arith.constant 0 : index
      %c16 = arith.constant 16 : index
      %74 = vector.load %arg15[%c0_43, %c16] : memref<8x32xbf16, #tpu.memory_space<vmem>>, vector<8x8xbf16>
      tpu.vector_store %arg15[%c0_43, %c16], %73 {strides = array<i32>} : memref<8x32xbf16, #tpu.memory_space<vmem>>, vector<8x8xbf16>,
      %75 = vector.extract_strided_slice %62 {offsets = [3, 0, 0], sizes = [1, 8, 8], strides = [1, 1, 1]} : vector<4x8x8xf32> to vector<1x8x8xf32>
      %76 = vector.shape_cast %75 : vector<1x8x8xf32> to vector<8x8xf32>
      %77 = arith.truncf %76 : vector<8x8xf32> to vector<8x8xbf16>
      %c0_44 = arith.constant 0 : index
      %c24 = arith.constant 24 : index
      %78 = vector.load %arg15[%c0_44, %c24] : memref<8x32xbf16, #tpu.memory_space<vmem>>, vector<8x8xbf16>
      tpu.vector_store %arg15[%c0_44, %c24], %77 {strides = array<i32>} : memref<8x32xbf16, #tpu.memory_space<vmem>>, vector<8x8xbf16>,
      %c0_45 = arith.constant 0 : index
      %c0_46 = arith.constant 0 : index
      %79 = vector.load %arg15[%c0_45, %c0_46] : memref<8x32xbf16, #tpu.memory_space<vmem>>, vector<8x32xbf16>
      %c0_47 = arith.constant 0 : index
      %c0_48 = arith.constant 0 : index
      %80 = vector.load %arg8[%c0_47, %c0_48] : memref<32x32xbf16, #tpu.memory_space<vmem>>, vector<32x32xbf16>
      %cst_49 = arith.constant dense<0.000000e+00> : vector<8x32xf32>
      %81 = tpu.matmul %79, %80, %cst_49 {dimension_numbers = #tpu.dot_dimension_numbers<[1], [0], [0], [1], [0, 0, 1, 1], [], []>} : vector<8x32xbf16>, vector<32x32xbf16>, vector<8x32xf32> -> vector<8x32xf32>
      %c0_50 = arith.constant 0 : index
      %c0_51 = arith.constant 0 : index
      %82 = vector.load %arg9[%c0_50, %c0_51] : memref<1x32xf32, #tpu.memory_space<vmem>>, vector<1x32xf32>
      %83 = vector.broadcast %82 : vector<1x32xf32> to vector<8x32xf32>
      %84 = arith.addf %81, %83 : vector<8x32xf32>
      %c0_52 = arith.constant 0 : index
      %c0_53 = arith.constant 0 : index
      %c0_54 = arith.constant 0 : index
      %85 = vector.load %arg10[%c0_52, %c0_53, %c0_54] : memref<1x8x32xf32, #tpu.memory_space<vmem>>, vector<1x8x32xf32>
      %86 = vector.shape_cast %85 : vector<1x8x32xf32> to vector<8x32xf32>
      %87 = vector.shape_cast %84 : vector<8x32xf32> to vector<1x8x32xf32>
      tpu.vector_store %arg10[%c0_52, %c0_53, %c0_54], %87 {strides = array<i32>} : memref<1x8x32xf32, #tpu.memory_space<vmem>>, vector<1x8x32xf32>,
    } else {
    }
    return
  }
  func.func @transform_0(%arg0: i32, %arg1: i32, %arg2: i32) -> (i32, i32, i32) {
    %c0_i32 = arith.constant 0 : i32
    %c0_i32_0 = arith.constant 0 : i32
    return %arg0, %arg1, %c0_i32 : i32, i32, i32
  }
  func.func @transform_1(%arg0: i32, %arg1: i32, %arg2: i32) -> (i32, i32, i32) {
    %c0_i32 = arith.constant 0 : i32
    %c0_i32_0 = arith.constant 0 : i32
    return %arg0, %arg2, %c0_i32 : i32, i32, i32
  }
  func.func @transform_2(%arg0: i32, %arg1: i32, %arg2: i32) -> (i32, i32) {
    %c0_i32 = arith.constant 0 : i32
    %c0_i32_0 = arith.constant 0 : i32
    %c0_i32_1 = arith.constant 0 : i32
    return %c0_i32, %c0_i32_0 : i32, i32
  }
  func.func @transform_3(%arg0: i32, %arg1: i32, %arg2: i32) -> (i32, i32) {
    %c0_i32 = arith.constant 0 : i32
    %c0_i32_0 = arith.constant 0 : i32
    %c0_i32_1 = arith.constant 0 : i32
    return %c0_i32, %c0_i32_0 : i32, i32
  }
  func.func @transform_4(%arg0: i32, %arg1: i32, %arg2: i32) -> (i32, i32) {
    %c0_i32 = arith.constant 0 : i32
    %c0_i32_0 = arith.constant 0 : i32
    %c0_i32_1 = arith.constant 0 : i32
    return %c0_i32, %c0_i32_0 : i32, i32
  }
  func.func @transform_5(%arg0: i32, %arg1: i32, %arg2: i32) -> (i32, i32) {
    %c0_i32 = arith.constant 0 : i32
    %c0_i32_0 = arith.constant 0 : i32
    %c0_i32_1 = arith.constant 0 : i32
    return %c0_i32, %c0_i32_0 : i32, i32
  }
  func.func @transform_6(%arg0: i32, %arg1: i32, %arg2: i32) -> (i32, i32) {
    %c0_i32 = arith.constant 0 : i32
    %c0_i32_0 = arith.constant 0 : i32
    %c0_i32_1 = arith.constant 0 : i32
    return %c0_i32, %c0_i32_0 : i32, i32
  }
  func.func @transform_7(%arg0: i32, %arg1: i32, %arg2: i32) -> (i32, i32, i32) {
    %c0_i32 = arith.constant 0 : i32
    %c0_i32_0 = arith.constant 0 : i32
    return %arg0, %arg1, %c0_i32 : i32, i32, i32
  }
}

</mosaic_0001>

<llo_original>
// kernel: tpu_custom_call.1
$region0: #{tpu_custom_call.1}
  #allocation0 [shape = 'u32[]', space=smem, size = 0x4, offset = 0x4, fixed_abs, tag = 'smem constant byte address 0x4 - core index']
  #allocation1 [shape = 'u32[144,128]{1,0:T(1,128)}', space=vmem, size = 0x12000, scoped, tag = 'internal scratch']
  #allocation2 [shape = 'bf16[4,8,8]{2,1,0:T(8,128)(2,1)}', space=vmem, size = 0x2000, scoped, tag = 'scratch operand']
  #allocation3 [shape = 'f32[4,8,1]{2,1,0:T(8,128)}', space=vmem, size = 0x4000, scoped, tag = 'scratch operand']
  #allocation4 [shape = 'f32[4,8,1]{2,1,0:T(8,128)}', space=vmem, size = 0x4000, scoped, tag = 'scratch operand']
  #allocation5 [shape = 'f32[4,8,8]{2,1,0:T(8,128)}', space=vmem, size = 0x4000, scoped, tag = 'scratch operand']
  #allocation6 [shape = 'bf16[8,32]{1,0:T(8,128)(2,1)}', space=vmem, size = 0x800, scoped, tag = 'scratch operand']
  %s0 = inlined_call_operand.hbm [shape: f32[2,16,32], index: 0, kind: input, shape index: {}]
  %s1 = inlined_call_operand.hbm [shape: f32[2,16,32], index: 1, kind: input, shape index: {}]
  %s2 = inlined_call_operand.hbm [shape: bf16[32,32], index: 2, kind: input, shape index: {}]
  %s3 = inlined_call_operand.hbm [shape: bf16[32,32], index: 3, kind: input, shape index: {}]
  %s4 = inlined_call_operand.hbm [shape: bf16[32,32], index: 4, kind: input, shape index: {}]
  %s5 = inlined_call_operand.vmem [shape: bf16[32,32], index: 5, kind: input, shape index: {}]
  %s6 = inlined_call_operand.vmem [shape: f32[1,32], index: 6, kind: input, shape index: {}]
  %s7 = inlined_call_operand.hbm [shape: f32[2,16,32], index: 7, kind: output, shape index: {}]
  %s8 = sld [smem:[#allocation0]]
  $region89: #{tpu_custom_call.1} parent=0
    _
  %s10 = ssub.s32 1, %s8
  %s11 = scalar_select 0, %s10, %s8
  $region1: #{tpu_custom_call.1} parent=0
    #allocation7 [shape = 'u8[8192]{0}', space=vmem, size = 0x2000, scoped, tag = 'input window, operand 0']
    #allocation8 [shape = 's32[2]{0}', space=sflag, size = 0x8, scoped, tag = 'scoped memory for tpu_custom_call.1']
    #allocation9 [shape = 's32[2]{0}', space=sflag, size = 0x8, scoped, tag = 'scoped memory for tpu_custom_call.1']
    #allocation10 [shape = 'u8[8192]{0}', space=vmem, size = 0x2000, scoped, tag = 'input window, operand 1']
    #allocation11 [shape = 's32[2]{0}', space=sflag, size = 0x8, scoped, tag = 'scoped memory for tpu_custom_call.1']
    #allocation12 [shape = 'u8[8192]{0}', space=vmem, size = 0x2000, scoped, tag = 'input window, operand 2, single buffered']
    #allocation13 [shape = 'u8[8192]{0}', space=vmem, size = 0x2000, scoped, tag = 'input window, operand 3, single buffered']
    #allocation14 [shape = 's32[1]{0}', space=sflag, size = 0x4, scoped, tag = 'scoped memory for tpu_custom_call.1']
    #allocation15 [shape = 'u8[8192]{0}', space=vmem, size = 0x2000, scoped, tag = 'input window, operand 4, single buffered']
    #allocation16 [shape = 'u8[8192]{0}', space=vmem, size = 0x2000, scoped, tag = 'output window, operand 0']
    %12 = vsyncpa [#allocation8], 0
    %s13 = scalar_lea.sflag [#allocation8], 1
    %14 = vsyncpa %s13, 0
    %15 = vsyncpa [#allocation11], 0
    %s16 = scalar_lea.sflag [#allocation11], 1
    %17 = vsyncpa %s16, 0
    %18 = vsyncpa [#allocation14], 0
    %19 = vsyncpa [#allocation9], 0
    %s20 = scalar_lea.sflag [#allocation9], 1
    %21 = vsyncpa %s20, 0
    loop: start=0, step=1, limit=10
    $region2: #{tpu_custom_call.1} parent=1 // loop_pre_header
      _
    $region3: #{tpu_custom_call.1} parent=1 // loop_header
      %s23 = sphi 0, %s27
      %p24 = scmp.ge.s32.totalorder %s23, 10
      %s30 = sphi 0, %s49
      %s31 = sphi 0, %s45
      %s32 = sphi 0, %s41
      %s33 = sphi 0, %s30
      %s34 = sphi 0, %s31
      %s35 = sphi 0, %s32
      %s36 = sphi 0, %s33
      %s37 = sphi 0, %s34
      %s38 = sphi 0, %s35
      %s54 = sphi 0, %s56
      %s57 = sphi 0, %s54
      %s58 = sphi 0, %s57
      %s74 = sphi 0, %s58
      %s82 = sphi 0, %s84
      %s85 = sphi 0, %s82
      %s86 = sphi 0, %s85
      %s102 = sphi 0, %s86
      %s106 = sphi 0, %s106
      %s108 = sphi 0, %s106
      %s109 = sphi 0, %s108
      %s123 = sphi 0, %s109
      %s127 = sphi 0, %s127
      %s129 = sphi 0, %s127
      %s130 = sphi 0, %s129
      %s144 = sphi 0, %s130
      %s148 = sphi 0, %s148
      %s150 = sphi 0, %s148
      %s151 = sphi 0, %s150
      %s165 = sphi 0, %s151
      %s169 = sphi 0, %s169
      %s171 = sphi 0, %s169
      %s172 = sphi 0, %s171
      %s186 = sphi 0, %s172
      %s190 = sphi 0, %s190
      %s192 = sphi 0, %s190
      %s193 = sphi 0, %s192
      %s207 = sphi 0, %s193
      %s215 = sphi 0, %s217
      %s218 = sphi 0, %s215
      %s219 = sphi 0, %s218
      %s235 = sphi 0, %s219
    $region4: #{tpu_custom_call.1} parent=1 // loop_header_branch
      %26 = sbr.rel (%p24) target = $region8
    $region5: #{tpu_custom_call.1} parent=1 // loop_body
      %s28 = ssub.s32 %s23, 1
      %s29 = ssub.s32 %s23, 2
      %s39 = sadd.s32 1, %s32
      %p40 = scmp.ge.s32.totalorder %s39, 2
      %s41 = scalar_select %p40, 0, %s39
      %s42 = sadd.s32 1, %s31
      %s43 = scalar_select %p40, %s42, %s31
      %p44 = scmp.ge.s32.totalorder %s43, 2
      %s45 = scalar_select %p44, 0, %s43
      %s46 = sadd.s32 1, %s30
      %s47 = scalar_select %p44, %s46, %s30
      %p48 = scmp.ge.s32.totalorder %s47, 2
      %s49 = scalar_select %p48, 0, %s47
      %s50 = ssub.s32 %s30, %s49
      %s51 = ssub.s32 %s31, %s45
      %s52 = sor.u32 %s50, %s51
      %p53 = scmp.eq.s32.totalorder %s52, 0
      %s55 = sadd.s32 %s54, 1
      %s56 = scalar_select %p53, %s54, %s55
      %p59 = pneg %p53
      %p60 = scmp.eq.s32.totalorder %s23, 7
      %p61 = por %p59, %p60
      %p62 = scmp.ne.s32.totalorder %s54, %s57
      %p63 = scmp.eq.s32.totalorder %s23, 0
      %p64 = por %p62, %p63
      %p65 = scmp.ne.s32.totalorder %s54, %s57
      %p66 = scmp.eq.s32.totalorder %s28, 7
      %p67 = por %p65, %p66
      %p68 = scmp.ne.s32.totalorder %s57, %s58
      %p69 = scmp.eq.s32.totalorder %s28, 0
      %p70 = por %p68, %p69
      %p71 = scmp.ne.s32.totalorder %s57, %s58
      %p72 = scmp.eq.s32.totalorder %s29, 7
      %p73 = por %p71, %p72
      %p75 = scmp.ne.s32.totalorder %s58, %s74
      %p76 = scmp.eq.s32.totalorder %s29, 0
      %p77 = por %p75, %p76
      %s78 = ssub.s32 %s30, %s49
      %s79 = ssub.s32 %s32, %s41
      %s80 = sor.u32 %s78, %s79
      %p81 = scmp.eq.s32.totalorder %s80, 0
      %s83 = sadd.s32 %s82, 1
      %s84 = scalar_select %p81, %s82, %s83
      %p87 = pneg %p81
      %p88 = scmp.eq.s32.totalorder %s23, 7
      %p89 = por %p87, %p88
      %p90 = scmp.ne.s32.totalorder %s82, %s85
      %p91 = scmp.eq.s32.totalorder %s23, 0
      %p92 = por %p90, %p91
      %p93 = scmp.ne.s32.totalorder %s82, %s85
      %p94 = scmp.eq.s32.totalorder %s28, 7
      %p95 = por %p93, %p94
      %p96 = scmp.ne.s32.totalorder %s85, %s86
      %p97 = scmp.eq.s32.totalorder %s28, 0
      %p98 = por %p96, %p97
      %p99 = scmp.ne.s32.totalorder %s85, %s86
      %p100 = scmp.eq.s32.totalorder %s29, 7
      %p101 = por %p99, %p100
      %p103 = scmp.ne.s32.totalorder %s86, %s102
      %p104 = scmp.eq.s32.totalorder %s29, 0
      %p105 = por %p103, %p104
      %s107 = sadd.s32 %s106, 1
      %p110 = scmp.eq.s32.totalorder %s23, 7
      %p111 = scmp.ne.s32.totalorder %s106, %s108
      %p112 = scmp.eq.s32.totalorder %s23, 0
      %p113 = por %p111, %p112
      %p114 = scmp.ne.s32.totalorder %s106, %s108
      %p115 = scmp.eq.s32.totalorder %s28, 7
      %p116 = por %p114, %p115
      %p117 = scmp.ne.s32.totalorder %s108, %s109
      %p118 = scmp.eq.s32.totalorder %s28, 0
      %p119 = por %p117, %p118
      %p120 = scmp.ne.s32.totalorder %s108, %s109
      %p121 = scmp.eq.s32.totalorder %s29, 7
      %p122 = por %p120, %p121
      %p124 = scmp.ne.s32.totalorder %s109, %s123
      %p125 = scmp.eq.s32.totalorder %s29, 0
      %p126 = por %p124, %p125
      %s128 = sadd.s32 %s127, 1
      %p131 = scmp.eq.s32.totalorder %s23, 7
      %p132 = scmp.ne.s32.totalorder %s127, %s129
      %p133 = scmp.eq.s32.totalorder %s23, 0
      %p134 = por %p132, %p133
      %p135 = scmp.ne.s32.totalorder %s127, %s129
      %p136 = scmp.eq.s32.totalorder %s28, 7
      %p137 = por %p135, %p136
      %p138 = scmp.ne.s32.totalorder %s129, %s130
      %p139 = scmp.eq.s32.totalorder %s28, 0
      %p140 = por %p138, %p139
      %p141 = scmp.ne.s32.totalorder %s129, %s130
      %p142 = scmp.eq.s32.totalorder %s29, 7
      %p143 = por %p141, %p142
      %p145 = scmp.ne.s32.totalorder %s130, %s144
      %p146 = scmp.eq.s32.totalorder %s29, 0
      %p147 = por %p145, %p146
      %s149 = sadd.s32 %s148, 1
      %p152 = scmp.eq.s32.totalorder %s23, 7
      %p153 = scmp.ne.s32.totalorder %s148, %s150
      %p154 = scmp.eq.s32.totalorder %s23, 0
      %p155 = por %p153, %p154
      %p156 = scmp.ne.s32.totalorder %s148, %s150
      %p157 = scmp.eq.s32.totalorder %s28, 7
      %p158 = por %p156, %p157
      %p159 = scmp.ne.s32.totalorder %s150, %s151
      %p160 = scmp.eq.s32.totalorder %s28, 0
      %p161 = por %p159, %p160
      %p162 = scmp.ne.s32.totalorder %s150, %s151
      %p163 = scmp.eq.s32.totalorder %s29, 7
      %p164 = por %p162, %p163
      %p166 = scmp.ne.s32.totalorder %s151, %s165
      %p167 = scmp.eq.s32.totalorder %s29, 0
      %p168 = por %p166, %p167
      %s170 = sadd.s32 %s169, 1
      %p173 = scmp.eq.s32.totalorder %s23, 7
      %p174 = scmp.ne.s32.totalorder %s169, %s171
      %p175 = scmp.eq.s32.totalorder %s23, 0
      %p176 = por %p174, %p175
      %p177 = scmp.ne.s32.totalorder %s169, %s171
      %p178 = scmp.eq.s32.totalorder %s28, 7
      %p179 = por %p177, %p178
      %p180 = scmp.ne.s32.totalorder %s171, %s172
      %p181 = scmp.eq.s32.totalorder %s28, 0
      %p182 = por %p180, %p181
      %p183 = scmp.ne.s32.totalorder %s171, %s172
      %p184 = scmp.eq.s32.totalorder %s29, 7
      %p185 = por %p183, %p184
      %p187 = scmp.ne.s32.totalorder %s172, %s186
      %p188 = scmp.eq.s32.totalorder %s29, 0
      %p189 = por %p187, %p188
      %s191 = sadd.s32 %s190, 1
      %p194 = scmp.eq.s32.totalorder %s23, 7
      %p195 = scmp.ne.s32.totalorder %s190, %s192
      %p196 = scmp.eq.s32.totalorder %s23, 0
      %p197 = por %p195, %p196
      %p198 = scmp.ne.s32.totalorder %s190, %s192
      %p199 = scmp.eq.s32.totalorder %s28, 7
      %p200 = por %p198, %p199
      %p201 = scmp.ne.s32.totalorder %s192, %s193
      %p202 = scmp.eq.s32.totalorder %s28, 0
      %p203 = por %p201, %p202
      %p204 = scmp.ne.s32.totalorder %s192, %s193
      %p205 = scmp.eq.s32.totalorder %s29, 7
      %p206 = por %p204, %p205
      %p208 = scmp.ne.s32.totalorder %s193, %s207
      %p209 = scmp.eq.s32.totalorder %s29, 0
      %p210 = por %p208, %p209
      %s211 = ssub.s32 %s30, %s49
      %s212 = ssub.s32 %s31, %s45
      %s213 = sor.u32 %s211, %s212
      %p214 = scmp.eq.s32.totalorder %s213, 0
      %s216 = sadd.s32 %s215, 1
      %s217 = scalar_select %p214, %s215, %s216
      %p220 = pneg %p214
      %p221 = scmp.eq.s32.totalorder %s23, 7
      %p222 = por %p220, %p221
      %p223 = scmp.ne.s32.totalorder %s215, %s218
      %p224 = scmp.eq.s32.totalorder %s23, 0
      %p225 = por %p223, %p224
      %p226 = scmp.ne.s32.totalorder %s215, %s218
      %p227 = scmp.eq.s32.totalorder %s28, 7
      %p228 = por %p226, %p227
      %p229 = scmp.ne.s32.totalorder %s218, %s219
      %p230 = scmp.eq.s32.totalorder %s28, 0
      %p231 = por %p229, %p230
      %p232 = scmp.ne.s32.totalorder %s218, %s219
      %p233 = scmp.eq.s32.totalorder %s29, 7
      %p234 = por %p232, %p233
      %p236 = scmp.ne.s32.totalorder %s219, %s235
      %p237 = scmp.eq.s32.totalorder %s29, 0
      %p238 = por %p236, %p237
      %p239 = scmp.le.s32.totalorder 1, %s23
      %p240 = scmp.lt.s32.totalorder %s23, 9
      %p241 = pnand %p239, %p240
      %p242 = pneg %p241
      // Predicated region
      $region9: #{tpu_custom_call.1} parent=5 // pred_check
        _
      $region10: #{tpu_custom_call.1} parent=5 // pred_check_branch
        %244 = sbr.rel (%p241) target = $region12
      $region11: #{tpu_custom_call.1} parent=5 // pred_region
        %s245 = ssub.s32 %s23, 1
        // Predicated region
        $region13: #{tpu_custom_call.1} parent=11 // pred_check
          %p246 = pneg %p119
        $region14: #{tpu_custom_call.1} parent=11 // pred_check_branch
          %248 = sbr.rel (%p246) target = $region16
        $region15: #{tpu_custom_call.1} parent=11 // pred_region
          %s250 = ssub.s32 256, 256
          %251 = vsyncadd [#allocation11], %s250
          %s252 = sshll.u32 [#allocation12], 4
          %s253 = int_to_ptr.vmem [resolvable:$true] %s252
          %258 = dma.hbm_to_vmem [thread:$0]  %s2, 256, %s253, [#allocation11], 64, 64, 4
        $region16: #{tpu_custom_call.1} parent=11 // pred_fallthru
          _
        // Predicated region
        $region17: #{tpu_custom_call.1} parent=11 // pred_check
          %p259 = pneg %p140
        $region18: #{tpu_custom_call.1} parent=11 // pred_check_branch
          %261 = sbr.rel (%p259) target = $region20
        $region19: #{tpu_custom_call.1} parent=11 // pred_region
          %s263 = ssub.s32 256, 256
          %264 = vsyncadd [#allocation14], %s263
          %s265 = sshll.u32 [#allocation13], 4
          %s266 = int_to_ptr.vmem [resolvable:$true] %s265
          %271 = dma.hbm_to_vmem [thread:$0]  %s3, 256, %s266, [#allocation14], 64, 64, 4
        $region20: #{tpu_custom_call.1} parent=11 // pred_fallthru
          _
        // Predicated region
        $region21: #{tpu_custom_call.1} parent=11 // pred_check
          %p272 = pneg %p161
        $region22: #{tpu_custom_call.1} parent=11 // pred_check_branch
          %274 = sbr.rel (%p272) target = $region24
        $region23: #{tpu_custom_call.1} parent=11 // pred_region
          %s276 = ssub.s32 256, 256
          %277 = vsyncadd [#allocation14], %s276
          %s278 = sshll.u32 [#allocation15], 4
          %s279 = int_to_ptr.vmem [resolvable:$true] %s278
          %284 = dma.hbm_to_vmem [thread:$0]  %s4, 256, %s279, [#allocation14], 64, 64, 4
        $region24: #{tpu_custom_call.1} parent=11 // pred_fallthru
          _
        // Predicated region
        $region25: #{tpu_custom_call.1} parent=11 // pred_check
          %p285 = pneg %p182
        $region26: #{tpu_custom_call.1} parent=11 // pred_check_branch
          %287 = sbr.rel (%p285) target = $region28
        $region27: #{tpu_custom_call.1} parent=11 // pred_region
          _
        $region28: #{tpu_custom_call.1} parent=11 // pred_fallthru
          _
        // Predicated region
        $region29: #{tpu_custom_call.1} parent=11 // pred_check
          %p288 = pneg %p203
        $region30: #{tpu_custom_call.1} parent=11 // pred_check_branch
          %290 = sbr.rel (%p288) target = $region32
        $region31: #{tpu_custom_call.1} parent=11 // pred_region
          _
        $region32: #{tpu_custom_call.1} parent=11 // pred_fallthru
          _
      $region12: #{tpu_custom_call.1} parent=5 // pred_fallthru
        _
      %p291 = scmp.lt.s32.totalorder %s23, 8
      // Predicated region
      $region33: #{tpu_custom_call.1} parent=5 // pred_check
        %p292 = pneg %p291
      $region34: #{tpu_custom_call.1} parent=5 // pred_check_branch
        %294 = sbr.rel (%p292) target = $region36
      $region35: #{tpu_custom_call.1} parent=5 // pred_region
        // Predicated region
        $region37: #{tpu_custom_call.1} parent=35 // pred_check
          %p295 = pneg %p64
        $region38: #{tpu_custom_call.1} parent=35 // pred_check_branch
          %297 = sbr.rel (%p295) target = $region40
        $region39: #{tpu_custom_call.1} parent=35 // pred_region
          %s298 = sand.u32 %s54, 1
          %s299 = scalar_lea.sflag [#allocation8], %s298
          %s300 = sand.u32 %s54, 1
          %s301 = smul.addr %s300, 8
          %s302 = scalar_lea.vmem [#allocation7], %s301
          %s304 = ssub.s32 128, 128
          %305 = vsyncadd %s299, %s304
          %s306 = smul.addr %s30, 2
          %s307 = sadd.s32 %s31, %s306
          %s308 = smul.addr %s307, 128
          %s309 = scalar_lea.hbm %s0, %s308
          %s311 = sshll.u32 %s302, 4
          %s312 = int_to_ptr.vmem [resolvable:$true] %s311
          %314 = dma.hbm_to_vmem [thread:$0]  %s309, 128, %s312, %s299
        $region40: #{tpu_custom_call.1} parent=35 // pred_fallthru
          _
        // Predicated region
        $region41: #{tpu_custom_call.1} parent=35 // pred_check
          %p315 = pneg %p92
        $region42: #{tpu_custom_call.1} parent=35 // pred_check_branch
          %317 = sbr.rel (%p315) target = $region44
        $region43: #{tpu_custom_call.1} parent=35 // pred_region
          %s318 = sand.u32 %s23, 1
          %s319 = scalar_lea.sflag [#allocation11], %s318
          %s320 = sand.u32 %s82, 1
          %s321 = smul.addr %s320, 8
          %s322 = scalar_lea.vmem [#allocation10], %s321
          %s324 = ssub.s32 128, 128
          %325 = vsyncadd %s319, %s324
          %s326 = smul.addr %s30, 2
          %s327 = sadd.s32 %s32, %s326
          %s328 = smul.addr %s327, 128
          %s329 = scalar_lea.hbm %s1, %s328
          %s331 = sshll.u32 %s322, 4
          %s332 = int_to_ptr.vmem [resolvable:$true] %s331
          %334 = dma.hbm_to_vmem [thread:$0]  %s329, 128, %s332, %s319
        $region44: #{tpu_custom_call.1} parent=35 // pred_fallthru
          _
      $region36: #{tpu_custom_call.1} parent=5 // pred_fallthru
        _
      %p335 = scmp.le.s32.totalorder 1, %s23
      %p336 = scmp.lt.s32.totalorder %s23, 9
      %p337 = pnand %p335, %p336
      %p338 = pneg %p337
      // Predicated region
      $region45: #{tpu_custom_call.1} parent=5 // pred_check
        _
      $region46: #{tpu_custom_call.1} parent=5 // pred_check_branch
        %340 = sbr.rel (%p337) target = $region48
      $region47: #{tpu_custom_call.1} parent=5 // pred_region
        %s341 = ssub.s32 %s23, 1
        %s342 = sand.u32 %s57, 1
        %s343 = scalar_lea.sflag [#allocation8], %s342
        %s344 = sand.u32 %s57, 1
        %s345 = smul.addr %s344, 8
        %s346 = scalar_lea.vmem [#allocation7], %s345
        // Predicated region
        $region49: #{tpu_custom_call.1} parent=47 // pred_check
          %p347 = pneg %p70
        $region50: #{tpu_custom_call.1} parent=47 // pred_check_branch
          %349 = sbr.rel (%p347) target = $region52
        $region51: #{tpu_custom_call.1} parent=47 // pred_region
          %350 = dma.done %s343, 128
        $region52: #{tpu_custom_call.1} parent=47 // pred_fallthru
          _
        %s351 = sand.u32 %s28, 1
        %s352 = scalar_lea.sflag [#allocation11], %s351
        %s353 = sand.u32 %s85, 1
        %s354 = smul.addr %s353, 8
        %s355 = scalar_lea.vmem [#allocation10], %s354
        // Predicated region
        $region53: #{tpu_custom_call.1} parent=47 // pred_check
          %p356 = pneg %p98
        $region54: #{tpu_custom_call.1} parent=47 // pred_check_branch
          %358 = sbr.rel (%p356) target = $region56
        $region55: #{tpu_custom_call.1} parent=47 // pred_region
          %359 = dma.done %s352, 128
        $region56: #{tpu_custom_call.1} parent=47 // pred_fallthru
          _
        // Predicated region
        $region57: #{tpu_custom_call.1} parent=47 // pred_check
          %p360 = pneg %p119
        $region58: #{tpu_custom_call.1} parent=47 // pred_check_branch
          %362 = sbr.rel (%p360) target = $region60
        $region59: #{tpu_custom_call.1} parent=47 // pred_region
          %363 = dma.done [#allocation11], 256
        $region60: #{tpu_custom_call.1} parent=47 // pred_fallthru
          _
        // Predicated region
        $region61: #{tpu_custom_call.1} parent=47 // pred_check
          %p364 = pneg %p140
        $region62: #{tpu_custom_call.1} parent=47 // pred_check_branch
          %366 = sbr.rel (%p364) target = $region64
        $region63: #{tpu_custom_call.1} parent=47 // pred_region
          %367 = dma.done [#allocation14], 256
        $region64: #{tpu_custom_call.1} parent=47 // pred_fallthru
          _
        // Predicated region
        $region65: #{tpu_custom_call.1} parent=47 // pred_check
          %p368 = pneg %p161
        $region66: #{tpu_custom_call.1} parent=47 // pred_check_branch
          %370 = sbr.rel (%p368) target = $region68
        $region67: #{tpu_custom_call.1} parent=47 // pred_region
          %371 = dma.done [#allocation14], 256
        $region68: #{tpu_custom_call.1} parent=47 // pred_fallthru
          _
        %s372 = sand.u32 %s57, 1
        %s373 = scalar_lea.sflag [#allocation8], %s372
        %s374 = sand.u32 %s57, 1
        %s375 = smul.addr %s374, 8
        %s376 = scalar_lea.vmem [#allocation7], %s375
        %p377 = pneg %p70
        %p378 = pneg %p67
        %s379 = sand.u32 %s28, 1
        %s380 = scalar_lea.sflag [#allocation11], %s379
        %s381 = sand.u32 %s85, 1
        %s382 = smul.addr %s381, 8
        %s383 = scalar_lea.vmem [#allocation10], %s382
        %p384 = pneg %p98
        %p385 = pneg %p95
        %p386 = pneg %p119
        %p387 = pneg %p116
        %p388 = pneg %p140
        %p389 = pneg %p137
        %p390 = pneg %p161
        %p391 = pneg %p158
        %p392 = pneg %p182
        %p393 = pneg %p179
        %p394 = pneg %p203
        %p395 = pneg %p200
        %p396 = pneg %p231
        %p397 = pneg %p228
        %s398 = sand.u32 %s218, 1
        %s399 = scalar_lea.sflag [#allocation9], %s398
        %s400 = sand.u32 %s218, 1
        %s401 = smul.addr %s400, 8
        %s402 = scalar_lea.vmem [#allocation16], %s401
        %p404 = scmp.eq.s32.totalorder %s35, 0
        // Predicated region
        $region69: #{tpu_custom_call.1} parent=47 // pred_check
          %p405 = pneg %p404
        $region70: #{tpu_custom_call.1} parent=47 // pred_check_branch
          %407 = sbr.rel (%p405) target = $region72
        $region71: #{tpu_custom_call.1} parent=47 // pred_region
          %v408 = vld [vmem:[%s346] sm:$0xff]
          %v409 = vpack.c.bf16 %v408, %v408
          %v410 = vld [vmem:[#allocation12] sm:$0xf]
          %v411 = vld [vmem:[#allocation12 + $0x4] sm:$0xf]
          %v412 = vld [vmem:[#allocation12 + $0x8] sm:$0xf]
          %v413 = vld [vmem:[#allocation12 + $0xc] sm:$0xf]
          %v418 = vunpack.c.l.b16 %v410
          %v419 = vunpack.c.l.b16 %v411
          %v420 = vunpack.c.l.b16 %v412
          %v421 = vunpack.c.l.b16 %v413
          %v422 = vpack.c.b16 %v419, %v418
          %v423 = vpack.c.b16 %v421, %v420
          %vm426 = vcmask 261120
          %v428 = vsel %vm426, %v409, 0
          %430 = vmatprep.subr.bf16.mxu0 0
          %431 = vmatpush1.bf16.msra.mxu0 %v422
          %432 = vmatprep.subr.bf16.mxu0 0
          %433 = vmatpush1.bf16.msra.mxu0 %v423
          %434 = vmatprep.subr.bf16.mxu0 0
          %435 = vmatpush1.bf16.msra.mxu0 0
          %436 = vmatprep.subr.bf16.mxu0 0
          %437 = vmatpush1.bf16.msra.mxu0 0
          %438 = vmatprep.subr.bf16.mxu0 0
          %439 = vmatpush1.bf16.msra.mxu0 0
          %440 = vmatprep.subr.bf16.mxu0 0
          %441 = vmatpush1.bf16.msra.mxu0 0
          %442 = vmatprep.subr.bf16.mxu0 0
          %443 = vmatpush1.bf16.msra.mxu0 0
          %444 = vmatprep.subr.bf16.mxu0 0
          %445 = vmatpush1.bf16.msra.mxu0 0
          %446 = vmatprep.subr.bf16.mxu0 0
          %447 = vmatpush1.bf16.msra.mxu0 0
          %448 = vmatprep.subr.bf16.mxu0 0
          %449 = vmatpush1.bf16.msra.mxu0 0
          %450 = vmatprep.subr.bf16.mxu0 0
          %451 = vmatpush1.bf16.msra.mxu0 0
          %452 = vmatprep.subr.bf16.mxu0 0
          %453 = vmatpush1.bf16.msra.mxu0 0
          %454 = vmatprep.subr.bf16.mxu0 0
          %455 = vmatpush1.bf16.msra.mxu0 0
          %456 = vmatprep.subr.bf16.mxu0 0
          %457 = vmatpush1.bf16.msra.mxu0 0
          %458 = vmatprep.subr.bf16.mxu0 0
          %459 = vmatpush1.bf16.msra.mxu0 0
          %460 = vmatprep.subr.bf16.mxu0 0
          %461 = vmatpush1.bf16.msra.mxu0 0
          %462 = vmatprep.mubr.bf16.mxu0 0
          %463 = vmatmul.mubr.bf16.gmra.mrb[0].mxu0 %v428
          %v464 = vpop.f32.mrb[0].mxu0
          %v465 = vadd.f32 0.0, %v464
          %v466 = vpop.f32.mrb[0].mxu0
          %v467 = vpop.f32.mrb[0].mxu0
          %v468 = vpop.f32.mrb[0].mxu0
          %469 = vdwg.mxu0
          %v470 = vpack.c.bf16 %v465, %v465
          %472 = vrot.lane.b32.xlu0 %v470, 120
          %v473 = vpop.permute.xlu0 %472
          %475 = vrot.lane.b32.xlu0 %v470, 112
          %v476 = vpop.permute.xlu0 %475
          %478 = vrot.lane.b32.xlu0 %v470, 104
          %v479 = vpop.permute.xlu0 %478
          %vm481 = vcmask 60416
          %482 = vst.msk [vmem:[#allocation2] sm:$0xf] %vm481, %v470
          %483 = vst.msk [vmem:[#allocation2 + $0x4] sm:$0xf] %vm481, %v473
          %484 = vst.msk [vmem:[#allocation2 + $0x8] sm:$0xf] %vm481, %v476
          %485 = vst.msk [vmem:[#allocation2 + $0xc] sm:$0xf] %vm481, %v479
          %vm486 = vcmask 7168
          %487 = vst.msk [vmem:[#allocation3] sm:$0xff] %vm486, -inf
          %488 = vst.msk [vmem:[#allocation3 + $0x8] sm:$0xff] %vm486, -inf
          %489 = vst.msk [vmem:[#allocation3 + $0x10] sm:$0xff] %vm486, -inf
          %490 = vst.msk [vmem:[#allocation3 + $0x18] sm:$0xff] %vm486, -inf
          %491 = vst.msk [vmem:[#allocation4] sm:$0xff] %vm486, 0.0
          %492 = vst.msk [vmem:[#allocation4 + $0x8] sm:$0xff] %vm486, 0.0
          %493 = vst.msk [vmem:[#allocation4 + $0x10] sm:$0xff] %vm486, 0.0
          %494 = vst.msk [vmem:[#allocation4 + $0x18] sm:$0xff] %vm486, 0.0
          %vm495 = vcmask 64512
          %496 = vst.msk [vmem:[#allocation5] sm:$0xff] %vm495, 0.0
          %497 = vst.msk [vmem:[#allocation5 + $0x8] sm:$0xff] %vm495, 0.0
          %498 = vst.msk [vmem:[#allocation5 + $0x10] sm:$0xff] %vm495, 0.0
          %499 = vst.msk [vmem:[#allocation5 + $0x18] sm:$0xff] %vm495, 0.0
        $region72: #{tpu_custom_call.1} parent=47 // pred_fallthru
          _
        %v500 = vld [vmem:[%s355] sm:$0xff]
        %v501 = vpack.c.bf16 %v500, %v500
        %v502 = vld [vmem:[#allocation13] sm:$0xf]
        %v503 = vld [vmem:[#allocation13 + $0x4] sm:$0xf]
        %v504 = vld [vmem:[#allocation13 + $0x8] sm:$0xf]
        %v505 = vld [vmem:[#allocation13 + $0xc] sm:$0xf]
        %v510 = vunpack.c.l.b16 %v502
        %v511 = vunpack.c.l.b16 %v503
        %v512 = vunpack.c.l.b16 %v504
        %v513 = vunpack.c.l.b16 %v505
        %v514 = vpack.c.b16 %v511, %v510
        %v515 = vpack.c.b16 %v513, %v512
        %vm518 = vcmask 261120
        %v520 = vsel %vm518, %v501, 0
        %522 = vmatprep.subr.bf16.mxu0 0
        %523 = vmatpush1.bf16.msra.mxu0 %v514
        %524 = vmatprep.subr.bf16.mxu0 0
        %525 = vmatpush1.bf16.msra.mxu0 %v515
        %526 = vmatprep.subr.bf16.mxu0 0
        %527 = vmatpush1.bf16.msra.mxu0 0
        %528 = vmatprep.subr.bf16.mxu0 0
        %529 = vmatpush1.bf16.msra.mxu0 0
        %530 = vmatprep.subr.bf16.mxu0 0
        %531 = vmatpush1.bf16.msra.mxu0 0
        %532 = vmatprep.subr.bf16.mxu0 0
        %533 = vmatpush1.bf16.msra.mxu0 0
        %534 = vmatprep.subr.bf16.mxu0 0
        %535 = vmatpush1.bf16.msra.mxu0 0
        %536 = vmatprep.subr.bf16.mxu0 0
        %537 = vmatpush1.bf16.msra.mxu0 0
        %538 = vmatprep.subr.bf16.mxu0 0
        %539 = vmatpush1.bf16.msra.mxu0 0
        %540 = vmatprep.subr.bf16.mxu0 0
        %541 = vmatpush1.bf16.msra.mxu0 0
        %542 = vmatprep.subr.bf16.mxu0 0
        %543 = vmatpush1.bf16.msra.mxu0 0
        %544 = vmatprep.subr.bf16.mxu0 0
        %545 = vmatpush1.bf16.msra.mxu0 0
        %546 = vmatprep.subr.bf16.mxu0 0
        %547 = vmatpush1.bf16.msra.mxu0 0
        %548 = vmatprep.subr.bf16.mxu0 0
        %549 = vmatpush1.bf16.msra.mxu0 0
        %550 = vmatprep.subr.bf16.mxu0 0
        %551 = vmatpush1.bf16.msra.mxu0 0
        %552 = vmatprep.subr.bf16.mxu0 0
        %553 = vmatpush1.bf16.msra.mxu0 0
        %554 = vmatprep.mubr.bf16.mxu0 0
        %555 = vmatmul.mubr.bf16.gmra.mrb[0].mxu0 %v520
        %v556 = vpop.f32.mrb[0].mxu0
        %v557 = vadd.f32 0.0, %v556
        %v558 = vpop.f32.mrb[0].mxu0
        %v559 = vpop.f32.mrb[0].mxu0
        %v560 = vpop.f32.mrb[0].mxu0
        %561 = vdwg.mxu0
        %v562 = vld [vmem:[#allocation15] sm:$0xf]
        %v563 = vld [vmem:[#allocation15 + $0x4] sm:$0xf]
        %v564 = vld [vmem:[#allocation15 + $0x8] sm:$0xf]
        %v565 = vld [vmem:[#allocation15 + $0xc] sm:$0xf]
        %v570 = vunpack.c.l.b16 %v562
        %v571 = vunpack.c.l.b16 %v563
        %v572 = vunpack.c.l.b16 %v564
        %v573 = vunpack.c.l.b16 %v565
        %v574 = vpack.c.b16 %v571, %v570
        %v575 = vpack.c.b16 %v573, %v572
        %578 = vmatprep.subr.bf16.mxu0 0
        %579 = vmatpush1.bf16.msra.mxu0 %v574
        %580 = vmatprep.subr.bf16.mxu0 0
        %581 = vmatpush1.bf16.msra.mxu0 %v575
        %582 = vmatprep.subr.bf16.mxu0 0
        %583 = vmatpush1.bf16.msra.mxu0 0
        %584 = vmatprep.subr.bf16.mxu0 0
        %585 = vmatpush1.bf16.msra.mxu0 0
        %586 = vmatprep.subr.bf16.mxu0 0
        %587 = vmatpush1.bf16.msra.mxu0 0
        %588 = vmatprep.subr.bf16.mxu0 0
        %589 = vmatpush1.bf16.msra.mxu0 0
        %590 = vmatprep.subr.bf16.mxu0 0
        %591 = vmatpush1.bf16.msra.mxu0 0
        %592 = vmatprep.subr.bf16.mxu0 0
        %593 = vmatpush1.bf16.msra.mxu0 0
        %594 = vmatprep.subr.bf16.mxu0 0
        %595 = vmatpush1.bf16.msra.mxu0 0
        %596 = vmatprep.subr.bf16.mxu0 0
        %597 = vmatpush1.bf16.msra.mxu0 0
        %598 = vmatprep.subr.bf16.mxu0 0
        %599 = vmatpush1.bf16.msra.mxu0 0
        %600 = vmatprep.subr.bf16.mxu0 0
        %601 = vmatpush1.bf16.msra.mxu0 0
        %602 = vmatprep.subr.bf16.mxu0 0
        %603 = vmatpush1.bf16.msra.mxu0 0
        %604 = vmatprep.subr.bf16.mxu0 0
        %605 = vmatpush1.bf16.msra.mxu0 0
        %606 = vmatprep.subr.bf16.mxu0 0
        %607 = vmatpush1.bf16.msra.mxu0 0
        %608 = vmatprep.subr.bf16.mxu0 0
        %609 = vmatpush1.bf16.msra.mxu0 0
        %610 = vmatprep.mubr.bf16.mxu0 0
        %611 = vmatmul.mubr.bf16.gmra.mrb[0].mxu0 %v520
        %v612 = vpop.f32.mrb[0].mxu0
        %v613 = vadd.f32 0.0, %v612
        %v614 = vpop.f32.mrb[0].mxu0
        %v615 = vpop.f32.mrb[0].mxu0
        %v616 = vpop.f32.mrb[0].mxu0
        %617 = vdwg.mxu0
        %v618 = vpack.c.bf16 %v557, %v557
        %620 = vrot.lane.b32.xlu0 %v618, 120
        %v621 = vpop.permute.xlu0 %620
        %622 = vrot.lane.b32.xlu0 %v618, 112
        %v623 = vpop.permute.xlu0 %622
        %624 = vrot.lane.b32.xlu0 %v618, 104
        %v625 = vpop.permute.xlu0 %624
        %v626 = vpack.c.bf16 %v613, %v613
        %628 = vrot.lane.b32.xlu0 %v626, 120
        %v629 = vpop.permute.xlu0 %628
        %630 = vrot.lane.b32.xlu0 %v626, 112
        %v631 = vpop.permute.xlu0 %630
        %632 = vrot.lane.b32.xlu0 %v626, 104
        %v633 = vpop.permute.xlu0 %632
        %v634 = vld [vmem:[#allocation2] sm:$0xf]
        %v635 = vld [vmem:[#allocation2 + $0x4] sm:$0xf]
        %v636 = vld [vmem:[#allocation2 + $0x8] sm:$0xf]
        %v637 = vld [vmem:[#allocation2 + $0xc] sm:$0xf]
        %vm638 = vcmask 64512
        %v640 = vsel %vm638, %v634, 0
        %v643 = vsel %vm638, %v618, 0
        %645 = vmatprep.subr.bf16.mxu0 0
        %646 = vmatpush1.bf16.xpose.msra.mxu0 %v643
        %647 = vmatprep.subr.bf16.mxu0 0
        %648 = vmatpush1.bf16.xpose.msra.mxu0 0
        %649 = vmatprep.subr.bf16.mxu0 0
        %650 = vmatpush1.bf16.xpose.msra.mxu0 0
        %651 = vmatprep.subr.bf16.mxu0 0
        %652 = vmatpush1.bf16.xpose.msra.mxu0 0
        %653 = vmatprep.subr.bf16.mxu0 0
        %654 = vmatpush1.bf16.xpose.msra.mxu0 0
        %655 = vmatprep.subr.bf16.mxu0 0
        %656 = vmatpush1.bf16.xpose.msra.mxu0 0
        %657 = vmatprep.subr.bf16.mxu0 0
        %658 = vmatpush1.bf16.xpose.msra.mxu0 0
        %659 = vmatprep.subr.bf16.mxu0 0
        %660 = vmatpush1.bf16.xpose.msra.mxu0 0
        %661 = vmatprep.subr.bf16.mxu0 0
        %662 = vmatpush1.bf16.xpose.msra.mxu0 0
        %663 = vmatprep.subr.bf16.mxu0 0
        %664 = vmatpush1.bf16.xpose.msra.mxu0 0
        %665 = vmatprep.subr.bf16.mxu0 0
        %666 = vmatpush1.bf16.xpose.msra.mxu0 0
        %667 = vmatprep.subr.bf16.mxu0 0
        %668 = vmatpush1.bf16.xpose.msra.mxu0 0
        %669 = vmatprep.subr.bf16.mxu0 0
        %670 = vmatpush1.bf16.xpose.msra.mxu0 0
        %671 = vmatprep.subr.bf16.mxu0 0
        %672 = vmatpush1.bf16.xpose.msra.mxu0 0
        %673 = vmatprep.subr.bf16.mxu0 0
        %674 = vmatpush1.bf16.xpose.msra.mxu0 0
        %675 = vmatprep.subr.bf16.mxu0 0
        %676 = vmatpush1.bf16.xpose.msra.mxu0 0
        %677 = vmatprep.mubr.bf16.mxu0 0
        %678 = vmatmul.mubr.bf16.gmra.mrb[0].mxu0 %v640
        %v679 = vpop.f32.mrb[0].mxu0
        %v680 = vadd.f32 0.0, %v679
        %v681 = vpop.f32.mrb[0].mxu0
        %v682 = vpop.f32.mrb[0].mxu0
        %v683 = vpop.f32.mrb[0].mxu0
        %684 = vdwg.mxu0
        %v686 = vsel %vm638, %v635, 0
        %v689 = vsel %vm638, %v621, 0
        %691 = vmatprep.subr.bf16.mxu0 0
        %692 = vmatpush1.bf16.xpose.msra.mxu0 %v689
        %693 = vmatprep.subr.bf16.mxu0 0
        %694 = vmatpush1.bf16.xpose.msra.mxu0 0
        %695 = vmatprep.subr.bf16.mxu0 0
        %696 = vmatpush1.bf16.xpose.msra.mxu0 0
        %697 = vmatprep.subr.bf16.mxu0 0
        %698 = vmatpush1.bf16.xpose.msra.mxu0 0
        %699 = vmatprep.subr.bf16.mxu0 0
        %700 = vmatpush1.bf16.xpose.msra.mxu0 0
        %701 = vmatprep.subr.bf16.mxu0 0
        %702 = vmatpush1.bf16.xpose.msra.mxu0 0
        %703 = vmatprep.subr.bf16.mxu0 0
        %704 = vmatpush1.bf16.xpose.msra.mxu0 0
        %705 = vmatprep.subr.bf16.mxu0 0
        %706 = vmatpush1.bf16.xpose.msra.mxu0 0
        %707 = vmatprep.subr.bf16.mxu0 0
        %708 = vmatpush1.bf16.xpose.msra.mxu0 0
        %709 = vmatprep.subr.bf16.mxu0 0
        %710 = vmatpush1.bf16.xpose.msra.mxu0 0
        %711 = vmatprep.subr.bf16.mxu0 0
        %712 = vmatpush1.bf16.xpose.msra.mxu0 0
        %713 = vmatprep.subr.bf16.mxu0 0
        %714 = vmatpush1.bf16.xpose.msra.mxu0 0
        %715 = vmatprep.subr.bf16.mxu0 0
        %716 = vmatpush1.bf16.xpose.msra.mxu0 0
        %717 = vmatprep.subr.bf16.mxu0 0
        %718 = vmatpush1.bf16.xpose.msra.mxu0 0
        %719 = vmatprep.subr.bf16.mxu0 0
        %720 = vmatpush1.bf16.xpose.msra.mxu0 0
        %721 = vmatprep.subr.bf16.mxu0 0
        %722 = vmatpush1.bf16.xpose.msra.mxu0 0
        %723 = vmatprep.mubr.bf16.mxu0 0
        %724 = vmatmul.mubr.bf16.gmra.mrb[0].mxu0 %v686
        %v725 = vpop.f32.mrb[0].mxu0
        %v726 = vadd.f32 0.0, %v725
        %v727 = vpop.f32.mrb[0].mxu0
        %v728 = vpop.f32.mrb[0].mxu0
        %v729 = vpop.f32.mrb[0].mxu0
        %730 = vdwg.mxu0
        %v732 = vsel %vm638, %v636, 0
        %v735 = vsel %vm638, %v623, 0
        %737 = vmatprep.subr.bf16.mxu0 0
        %738 = vmatpush1.bf16.xpose.msra.mxu0 %v735
        %739 = vmatprep.subr.bf16.mxu0 0
        %740 = vmatpush1.bf16.xpose.msra.mxu0 0
        %741 = vmatprep.subr.bf16.mxu0 0
        %742 = vmatpush1.bf16.xpose.msra.mxu0 0
        %743 = vmatprep.subr.bf16.mxu0 0
        %744 = vmatpush1.bf16.xpose.msra.mxu0 0
        %745 = vmatprep.subr.bf16.mxu0 0
        %746 = vmatpush1.bf16.xpose.msra.mxu0 0
        %747 = vmatprep.subr.bf16.mxu0 0
        %748 = vmatpush1.bf16.xpose.msra.mxu0 0
        %749 = vmatprep.subr.bf16.mxu0 0
        %750 = vmatpush1.bf16.xpose.msra.mxu0 0
        %751 = vmatprep.subr.bf16.mxu0 0
        %752 = vmatpush1.bf16.xpose.msra.mxu0 0
        %753 = vmatprep.subr.bf16.mxu0 0
        %754 = vmatpush1.bf16.xpose.msra.mxu0 0
        %755 = vmatprep.subr.bf16.mxu0 0
        %756 = vmatpush1.bf16.xpose.msra.mxu0 0
        %757 = vmatprep.subr.bf16.mxu0 0
        %758 = vmatpush1.bf16.xpose.msra.mxu0 0
        %759 = vmatprep.subr.bf16.mxu0 0
        %760 = vmatpush1.bf16.xpose.msra.mxu0 0
        %761 = vmatprep.subr.bf16.mxu0 0
        %762 = vmatpush1.bf16.xpose.msra.mxu0 0
        %763 = vmatprep.subr.bf16.mxu0 0
        %764 = vmatpush1.bf16.xpose.msra.mxu0 0
        %765 = vmatprep.subr.bf16.mxu0 0
        %766 = vmatpush1.bf16.xpose.msra.mxu0 0
        %767 = vmatprep.subr.bf16.mxu0 0
        %768 = vmatpush1.bf16.xpose.msra.mxu0 0
        %769 = vmatprep.mubr.bf16.mxu0 0
        %770 = vmatmul.mubr.bf16.gmra.mrb[0].mxu0 %v732
        %v771 = vpop.f32.mrb[0].mxu0
        %v772 = vadd.f32 0.0, %v771
        %v773 = vpop.f32.mrb[0].mxu0
        %v774 = vpop.f32.mrb[0].mxu0
        %v775 = vpop.f32.mrb[0].mxu0
        %776 = vdwg.mxu0
        %v778 = vsel %vm638, %v637, 0
        %v781 = vsel %vm638, %v625, 0
        %783 = vmatprep.subr.bf16.mxu0 0
        %784 = vmatpush1.bf16.xpose.msra.mxu0 %v781
        %785 = vmatprep.subr.bf16.mxu0 0
        %786 = vmatpush1.bf16.xpose.msra.mxu0 0
        %787 = vmatprep.subr.bf16.mxu0 0
        %788 = vmatpush1.bf16.xpose.msra.mxu0 0
        %789 = vmatprep.subr.bf16.mxu0 0
        %790 = vmatpush1.bf16.xpose.msra.mxu0 0
        %791 = vmatprep.subr.bf16.mxu0 0
        %792 = vmatpush1.bf16.xpose.msra.mxu0 0
        %793 = vmatprep.subr.bf16.mxu0 0
        %794 = vmatpush1.bf16.xpose.msra.mxu0 0
        %795 = vmatprep.subr.bf16.mxu0 0
        %796 = vmatpush1.bf16.xpose.msra.mxu0 0
        %797 = vmatprep.subr.bf16.mxu0 0
        %798 = vmatpush1.bf16.xpose.msra.mxu0 0
        %799 = vmatprep.subr.bf16.mxu0 0
        %800 = vmatpush1.bf16.xpose.msra.mxu0 0
        %801 = vmatprep.subr.bf16.mxu0 0
        %802 = vmatpush1.bf16.xpose.msra.mxu0 0
        %803 = vmatprep.subr.bf16.mxu0 0
        %804 = vmatpush1.bf16.xpose.msra.mxu0 0
        %805 = vmatprep.subr.bf16.mxu0 0
        %806 = vmatpush1.bf16.xpose.msra.mxu0 0
        %807 = vmatprep.subr.bf16.mxu0 0
        %808 = vmatpush1.bf16.xpose.msra.mxu0 0
        %809 = vmatprep.subr.bf16.mxu0 0
        %810 = vmatpush1.bf16.xpose.msra.mxu0 0
        %811 = vmatprep.subr.bf16.mxu0 0
        %812 = vmatpush1.bf16.xpose.msra.mxu0 0
        %813 = vmatprep.subr.bf16.mxu0 0
        %814 = vmatpush1.bf16.xpose.msra.mxu0 0
        %815 = vmatprep.mubr.bf16.mxu0 0
        %816 = vmatmul.mubr.bf16.gmra.mrb[0].mxu0 %v778
        %v817 = vpop.f32.mrb[0].mxu0
        %v818 = vadd.f32 0.0, %v817
        %v819 = vpop.f32.mrb[0].mxu0
        %v820 = vpop.f32.mrb[0].mxu0
        %v821 = vpop.f32.mrb[0].mxu0
        %822 = vdwg.mxu0
        %v823 = vld [vmem:[#allocation3] sm:$0xff]
        %v824 = vld [vmem:[#allocation3 + $0x8] sm:$0xff]
        %v825 = vld [vmem:[#allocation3 + $0x10] sm:$0xff]
        %v826 = vld [vmem:[#allocation3 + $0x18] sm:$0xff]
        %v827 = vsel %vm638, %v680, -inf
        %828 = vmax.xlane.f32.xlu0 %v827
        %v829 = vpop.xlane.xlu0 %828
        %v830 = vsel %vm638, %v726, -inf
        %831 = vmax.xlane.f32.xlu0 %v830
        %v832 = vpop.xlane.xlu0 %831
        %v833 = vsel %vm638, %v772, -inf
        %834 = vmax.xlane.f32.xlu0 %v833
        %v835 = vpop.xlane.xlu0 %834
        %v836 = vsel %vm638, %v818, -inf
        %837 = vmax.xlane.f32.xlu0 %v836
        %v838 = vpop.xlane.xlu0 %837
        %v839 = vmax.f32 %v823, %v829
        %v840 = vmax.f32 %v824, %v832
        %v841 = vmax.f32 %v825, %v835
        %v842 = vmax.f32 %v826, %v838
        %v843 = vsub.f32 %v823, %v839
        %v844 = vsub.f32 %v824, %v840
        %v845 = vsub.f32 %v825, %v841
        %v846 = vsub.f32 %v826, %v842
        %v847 = vmul.f32 %v843, 1.442695
        %v848 = vpow.pop %v847
        %v849 = vmul.f32 %v844, 1.442695
        %v850 = vpow.pop %v849
        %v851 = vmul.f32 %v845, 1.442695
        %v852 = vpow.pop %v851
        %v853 = vmul.f32 %v846, 1.442695
        %v854 = vpow.pop %v853
        %856 = vset.pattern.permute.xlu0 0
        %857 = vperm.xlu0 %856, %v839
        %v858 = vpop.permute.xlu0 %857
        %861 = vset.pattern.permute.xlu0 0
        %862 = vperm.xlu0 %861, %v840
        %v863 = vpop.permute.xlu0 %862
        %866 = vset.pattern.permute.xlu0 0
        %867 = vperm.xlu0 %866, %v841
        %v868 = vpop.permute.xlu0 %867
        %871 = vset.pattern.permute.xlu0 0
        %872 = vperm.xlu0 %871, %v842
        %v873 = vpop.permute.xlu0 %872
        %v875 = vsub.f32 %v680, %v858
        %v876 = vsub.f32 %v726, %v863
        %v877 = vsub.f32 %v772, %v868
        %v878 = vsub.f32 %v818, %v873
        %v879 = vmul.f32 %v875, 1.442695
        %v880 = vpow.pop %v879
        %v881 = vmul.f32 %v876, 1.442695
        %v882 = vpow.pop %v881
        %v883 = vmul.f32 %v877, 1.442695
        %v884 = vpow.pop %v883
        %v885 = vmul.f32 %v878, 1.442695
        %v886 = vpow.pop %v885
        %v887 = vld [vmem:[#allocation4] sm:$0xff]
        %v888 = vld [vmem:[#allocation4 + $0x8] sm:$0xff]
        %v889 = vld [vmem:[#allocation4 + $0x10] sm:$0xff]
        %v890 = vld [vmem:[#allocation4 + $0x18] sm:$0xff]
        %v891 = vmul.f32 %v848, %v887
        %v892 = vmul.f32 %v850, %v888
        %v893 = vmul.f32 %v852, %v889
        %v894 = vmul.f32 %v854, %v890
        %v895 = vsel %vm638, %v880, 0.0
        %896 = vadd.xlane.f32.xlu0 %v895
        %v897 = vpop.xlane.xlu0 %896
        %v898 = vsel %vm638, %v882, 0.0
        %899 = vadd.xlane.f32.xlu0 %v898
        %v900 = vpop.xlane.xlu0 %899
        %v901 = vsel %vm638, %v884, 0.0
        %902 = vadd.xlane.f32.xlu0 %v901
        %v903 = vpop.xlane.xlu0 %902
        %v904 = vsel %vm638, %v886, 0.0
        %905 = vadd.xlane.f32.xlu0 %v904
        %v906 = vpop.xlane.xlu0 %905
        %v907 = vadd.f32 %v891, %v897
        %v908 = vadd.f32 %v892, %v900
        %v909 = vadd.f32 %v893, %v903
        %v910 = vadd.f32 %v894, %v906
        %vm911 = vcmask 7168
        %912 = vst.msk [vmem:[#allocation4] sm:$0xff] %vm911, %v907
        %913 = vst.msk [vmem:[#allocation4 + $0x8] sm:$0xff] %vm911, %v908
        %914 = vst.msk [vmem:[#allocation4 + $0x10] sm:$0xff] %vm911, %v909
        %915 = vst.msk [vmem:[#allocation4 + $0x18] sm:$0xff] %vm911, %v910
        %v916 = vpack.c.bf16 %v880, %v880
        %v917 = vpack.c.bf16 %v882, %v882
        %v918 = vpack.c.bf16 %v884, %v884
        %v919 = vpack.c.bf16 %v886, %v886
        %v921 = vsel %vm638, %v916, 0
        %vm923 = vcmask 1043456
        %v925 = vsel %vm923, %v626, 0
        %927 = vmatprep.subr.bf16.mxu0 0
        %928 = vmatpush1.bf16.msra.mxu0 %v925
        %929 = vmatprep.subr.bf16.mxu0 0
        %930 = vmatpush1.bf16.msra.mxu0 0
        %931 = vmatprep.subr.bf16.mxu0 0
        %932 = vmatpush1.bf16.msra.mxu0 0
        %933 = vmatprep.subr.bf16.mxu0 0
        %934 = vmatpush1.bf16.msra.mxu0 0
        %935 = vmatprep.subr.bf16.mxu0 0
        %936 = vmatpush1.bf16.msra.mxu0 0
        %937 = vmatprep.subr.bf16.mxu0 0
        %938 = vmatpush1.bf16.msra.mxu0 0
        %939 = vmatprep.subr.bf16.mxu0 0
        %940 = vmatpush1.bf16.msra.mxu0 0
        %941 = vmatprep.subr.bf16.mxu0 0
        %942 = vmatpush1.bf16.msra.mxu0 0
        %943 = vmatprep.subr.bf16.mxu0 0
        %944 = vmatpush1.bf16.msra.mxu0 0
        %945 = vmatprep.subr.bf16.mxu0 0
        %946 = vmatpush1.bf16.msra.mxu0 0
        %947 = vmatprep.subr.bf16.mxu0 0
        %948 = vmatpush1.bf16.msra.mxu0 0
        %949 = vmatprep.subr.bf16.mxu0 0
        %950 = vmatpush1.bf16.msra.mxu0 0
        %951 = vmatprep.subr.bf16.mxu0 0
        %952 = vmatpush1.bf16.msra.mxu0 0
        %953 = vmatprep.subr.bf16.mxu0 0
        %954 = vmatpush1.bf16.msra.mxu0 0
        %955 = vmatprep.subr.bf16.mxu0 0
        %956 = vmatpush1.bf16.msra.mxu0 0
        %957 = vmatprep.subr.bf16.mxu0 0
        %958 = vmatpush1.bf16.msra.mxu0 0
        %959 = vmatprep.mubr.bf16.mxu0 0
        %960 = vmatmul.mubr.bf16.gmra.mrb[0].mxu0 %v921
        %v961 = vpop.f32.mrb[0].mxu0
        %v962 = vadd.f32 0.0, %v961
        %v963 = vpop.f32.mrb[0].mxu0
        %v964 = vpop.f32.mrb[0].mxu0
        %v965 = vpop.f32.mrb[0].mxu0
        %966 = vdwg.mxu0
        %v968 = vsel %vm638, %v917, 0
        %v971 = vsel %vm923, %v629, 0
        %973 = vmatprep.subr.bf16.mxu0 0
        %974 = vmatpush1.bf16.msra.mxu0 %v971
        %975 = vmatprep.subr.bf16.mxu0 0
        %976 = vmatpush1.bf16.msra.mxu0 0
        %977 = vmatprep.subr.bf16.mxu0 0
        %978 = vmatpush1.bf16.msra.mxu0 0
        %979 = vmatprep.subr.bf16.mxu0 0
        %980 = vmatpush1.bf16.msra.mxu0 0
        %981 = vmatprep.subr.bf16.mxu0 0
        %982 = vmatpush1.bf16.msra.mxu0 0
        %983 = vmatprep.subr.bf16.mxu0 0
        %984 = vmatpush1.bf16.msra.mxu0 0
        %985 = vmatprep.subr.bf16.mxu0 0
        %986 = vmatpush1.bf16.msra.mxu0 0
        %987 = vmatprep.subr.bf16.mxu0 0
        %988 = vmatpush1.bf16.msra.mxu0 0
        %989 = vmatprep.subr.bf16.mxu0 0
        %990 = vmatpush1.bf16.msra.mxu0 0
        %991 = vmatprep.subr.bf16.mxu0 0
        %992 = vmatpush1.bf16.msra.mxu0 0
        %993 = vmatprep.subr.bf16.mxu0 0
        %994 = vmatpush1.bf16.msra.mxu0 0
        %995 = vmatprep.subr.bf16.mxu0 0
        %996 = vmatpush1.bf16.msra.mxu0 0
        %997 = vmatprep.subr.bf16.mxu0 0
        %998 = vmatpush1.bf16.msra.mxu0 0
        %999 = vmatprep.subr.bf16.mxu0 0
        %1000 = vmatpush1.bf16.msra.mxu0 0
        %1001 = vmatprep.subr.bf16.mxu0 0
        %1002 = vmatpush1.bf16.msra.mxu0 0
        %1003 = vmatprep.subr.bf16.mxu0 0
        %1004 = vmatpush1.bf16.msra.mxu0 0
        %1005 = vmatprep.mubr.bf16.mxu0 0
        %1006 = vmatmul.mubr.bf16.gmra.mrb[0].mxu0 %v968
        %v1007 = vpop.f32.mrb[0].mxu0
        %v1008 = vadd.f32 0.0, %v1007
        %v1009 = vpop.f32.mrb[0].mxu0
        %v1010 = vpop.f32.mrb[0].mxu0
        %v1011 = vpop.f32.mrb[0].mxu0
        %1012 = vdwg.mxu0
        %v1014 = vsel %vm638, %v918, 0
        %v1017 = vsel %vm923, %v631, 0
        %1019 = vmatprep.subr.bf16.mxu0 0
        %1020 = vmatpush1.bf16.msra.mxu0 %v1017
        %1021 = vmatprep.subr.bf16.mxu0 0
        %1022 = vmatpush1.bf16.msra.mxu0 0
        %1023 = vmatprep.subr.bf16.mxu0 0
        %1024 = vmatpush1.bf16.msra.mxu0 0
        %1025 = vmatprep.subr.bf16.mxu0 0
        %1026 = vmatpush1.bf16.msra.mxu0 0
        %1027 = vmatprep.subr.bf16.mxu0 0
        %1028 = vmatpush1.bf16.msra.mxu0 0
        %1029 = vmatprep.subr.bf16.mxu0 0
        %1030 = vmatpush1.bf16.msra.mxu0 0
        %1031 = vmatprep.subr.bf16.mxu0 0
        %1032 = vmatpush1.bf16.msra.mxu0 0
        %1033 = vmatprep.subr.bf16.mxu0 0
        %1034 = vmatpush1.bf16.msra.mxu0 0
        %1035 = vmatprep.subr.bf16.mxu0 0
        %1036 = vmatpush1.bf16.msra.mxu0 0
        %1037 = vmatprep.subr.bf16.mxu0 0
        %1038 = vmatpush1.bf16.msra.mxu0 0
        %1039 = vmatprep.subr.bf16.mxu0 0
        %1040 = vmatpush1.bf16.msra.mxu0 0
        %1041 = vmatprep.subr.bf16.mxu0 0
        %1042 = vmatpush1.bf16.msra.mxu0 0
        %1043 = vmatprep.subr.bf16.mxu0 0
        %1044 = vmatpush1.bf16.msra.mxu0 0
        %1045 = vmatprep.subr.bf16.mxu0 0
        %1046 = vmatpush1.bf16.msra.mxu0 0
        %1047 = vmatprep.subr.bf16.mxu0 0
        %1048 = vmatpush1.bf16.msra.mxu0 0
        %1049 = vmatprep.subr.bf16.mxu0 0
        %1050 = vmatpush1.bf16.msra.mxu0 0
        %1051 = vmatprep.mubr.bf16.mxu0 0
        %1052 = vmatmul.mubr.bf16.gmra.mrb[0].mxu0 %v1014
        %v1053 = vpop.f32.mrb[0].mxu0
        %v1054 = vadd.f32 0.0, %v1053
        %v1055 = vpop.f32.mrb[0].mxu0
        %v1056 = vpop.f32.mrb[0].mxu0
        %v1057 = vpop.f32.mrb[0].mxu0
        %1058 = vdwg.mxu0
        %v1060 = vsel %vm638, %v919, 0
        %v1063 = vsel %vm923, %v633, 0
        %1065 = vmatprep.subr.bf16.mxu0 0
        %1066 = vmatpush1.bf16.msra.mxu0 %v1063
        %1067 = vmatprep.subr.bf16.mxu0 0
        %1068 = vmatpush1.bf16.msra.mxu0 0
        %1069 = vmatprep.subr.bf16.mxu0 0
        %1070 = vmatpush1.bf16.msra.mxu0 0
        %1071 = vmatprep.subr.bf16.mxu0 0
        %1072 = vmatpush1.bf16.msra.mxu0 0
        %1073 = vmatprep.subr.bf16.mxu0 0
        %1074 = vmatpush1.bf16.msra.mxu0 0
        %1075 = vmatprep.subr.bf16.mxu0 0
        %1076 = vmatpush1.bf16.msra.mxu0 0
        %1077 = vmatprep.subr.bf16.mxu0 0
        %1078 = vmatpush1.bf16.msra.mxu0 0
        %1079 = vmatprep.subr.bf16.mxu0 0
        %1080 = vmatpush1.bf16.msra.mxu0 0
        %1081 = vmatprep.subr.bf16.mxu0 0
        %1082 = vmatpush1.bf16.msra.mxu0 0
        %1083 = vmatprep.subr.bf16.mxu0 0
        %1084 = vmatpush1.bf16.msra.mxu0 0
        %1085 = vmatprep.subr.bf16.mxu0 0
        %1086 = vmatpush1.bf16.msra.mxu0 0
        %1087 = vmatprep.subr.bf16.mxu0 0
        %1088 = vmatpush1.bf16.msra.mxu0 0
        %1089 = vmatprep.subr.bf16.mxu0 0
        %1090 = vmatpush1.bf16.msra.mxu0 0
        %1091 = vmatprep.subr.bf16.mxu0 0
        %1092 = vmatpush1.bf16.msra.mxu0 0
        %1093 = vmatprep.subr.bf16.mxu0 0
        %1094 = vmatpush1.bf16.msra.mxu0 0
        %1095 = vmatprep.subr.bf16.mxu0 0
        %1096 = vmatpush1.bf16.msra.mxu0 0
        %1097 = vmatprep.mubr.bf16.mxu0 0
        %1098 = vmatmul.mubr.bf16.gmra.mrb[0].mxu0 %v1060
        %v1099 = vpop.f32.mrb[0].mxu0
        %v1100 = vadd.f32 0.0, %v1099
        %v1101 = vpop.f32.mrb[0].mxu0
        %v1102 = vpop.f32.mrb[0].mxu0
        %v1103 = vpop.f32.mrb[0].mxu0
        %1104 = vdwg.mxu0
        %v1105 = vld [vmem:[#allocation5] sm:$0xff]
        %v1106 = vld [vmem:[#allocation5 + $0x8] sm:$0xff]
        %v1107 = vld [vmem:[#allocation5 + $0x10] sm:$0xff]
        %v1108 = vld [vmem:[#allocation5 + $0x18] sm:$0xff]
        %1110 = vset.pattern.permute.xlu0 0
        %1111 = vperm.xlu0 %1110, %v848
        %v1112 = vpop.permute.xlu0 %1111
        %1115 = vset.pattern.permute.xlu0 0
        %1116 = vperm.xlu0 %1115, %v850
        %v1117 = vpop.permute.xlu0 %1116
        %1120 = vset.pattern.permute.xlu0 0
        %1121 = vperm.xlu0 %1120, %v852
        %v1122 = vpop.permute.xlu0 %1121
        %1125 = vset.pattern.permute.xlu0 0
        %1126 = vperm.xlu0 %1125, %v854
        %v1127 = vpop.permute.xlu0 %1126
        %v1129 = vmul.f32 %v1112, %v1105
        %v1130 = vmul.f32 %v1117, %v1106
        %v1131 = vmul.f32 %v1122, %v1107
        %v1132 = vmul.f32 %v1127, %v1108
        %v1133 = vadd.f32 %v1129, %v962
        %v1134 = vadd.f32 %v1130, %v1008
        %v1135 = vadd.f32 %v1131, %v1054
        %v1136 = vadd.f32 %v1132, %v1100
        %1137 = vst.msk [vmem:[#allocation5] sm:$0xff] %vm638, %v1133
        %1138 = vst.msk [vmem:[#allocation5 + $0x8] sm:$0xff] %vm638, %v1134
        %1139 = vst.msk [vmem:[#allocation5 + $0x10] sm:$0xff] %vm638, %v1135
        %1140 = vst.msk [vmem:[#allocation5 + $0x18] sm:$0xff] %vm638, %v1136
        %1141 = vst.msk [vmem:[#allocation3] sm:$0xff] %vm911, %v839
        %1142 = vst.msk [vmem:[#allocation3 + $0x8] sm:$0xff] %vm911, %v840
        %1143 = vst.msk [vmem:[#allocation3 + $0x10] sm:$0xff] %vm911, %v841
        %1144 = vst.msk [vmem:[#allocation3 + $0x18] sm:$0xff] %vm911, %v842
        %p1145 = scmp.eq.s32.totalorder %s35, 1
        // Predicated region
        $region73: #{tpu_custom_call.1} parent=47 // pred_check
          %p1146 = pneg %p1145
        $region74: #{tpu_custom_call.1} parent=47 // pred_check_branch
          %1148 = sbr.rel (%p1146) target = $region76
        $region75: #{tpu_custom_call.1} parent=47 // pred_region
          %v1149 = vld [vmem:[#allocation5] sm:$0xff]
          %v1150 = vld [vmem:[#allocation5 + $0x8] sm:$0xff]
          %v1151 = vld [vmem:[#allocation5 + $0x10] sm:$0xff]
          %v1152 = vld [vmem:[#allocation5 + $0x18] sm:$0xff]
          %v1153 = vld [vmem:[#allocation4] sm:$0xff]
          %v1154 = vld [vmem:[#allocation4 + $0x8] sm:$0xff]
          %v1155 = vld [vmem:[#allocation4 + $0x10] sm:$0xff]
          %v1156 = vld [vmem:[#allocation4 + $0x18] sm:$0xff]
          %v1157 = vrcp.pop %v1153
          %v1158 = vrcp.pop %v1154
          %v1159 = vrcp.pop %v1155
          %v1160 = vrcp.pop %v1156
          %1162 = vset.pattern.permute.xlu0 0
          %1163 = vperm.xlu0 %1162, %v1157
          %v1164 = vpop.permute.xlu0 %1163
          %1167 = vset.pattern.permute.xlu0 0
          %1168 = vperm.xlu0 %1167, %v1158
          %v1169 = vpop.permute.xlu0 %1168
          %1172 = vset.pattern.permute.xlu0 0
          %1173 = vperm.xlu0 %1172, %v1159
          %v1174 = vpop.permute.xlu0 %1173
          %1177 = vset.pattern.permute.xlu0 0
          %1178 = vperm.xlu0 %1177, %v1160
          %v1179 = vpop.permute.xlu0 %1178
          %v1181 = vmul.f32 %v1149, %v1164
          %v1182 = vmul.f32 %v1150, %v1169
          %v1183 = vmul.f32 %v1151, %v1174
          %v1184 = vmul.f32 %v1152, %v1179
          %v1185 = vpack.c.bf16 %v1181, %v1181
          %vm1186 = vcmask 60416
          %1187 = vst.msk [vmem:[#allocation6] sm:$0xf] %vm1186, %v1185
          %v1188 = vpack.c.bf16 %v1182, %v1182
          %v1190 = vunpack.c.l.b16 %v1188
          %v1191 = vpack.c.b16 %v1190, %v1190
          %1192 = vrot.lane.b32.xlu0 %v1191, 8
          %v1193 = vpop.permute.xlu0 %1192
          %vm1195 = vcmask 126016
          %1196 = vst.msk [vmem:[#allocation6] sm:$0xf] %vm1195, %v1193
          %v1197 = vpack.c.bf16 %v1183, %v1183
          %v1199 = vunpack.c.l.b16 %v1197
          %v1200 = vpack.c.b16 %v1199, %v1199
          %1201 = vrot.lane.b32.xlu0 %v1200, 16
          %v1202 = vpop.permute.xlu0 %1201
          %vm1204 = vcmask 191616
          %1205 = vst.msk [vmem:[#allocation6] sm:$0xf] %vm1204, %v1202
          %v1206 = vpack.c.bf16 %v1184, %v1184
          %v1208 = vunpack.c.l.b16 %v1206
          %v1209 = vpack.c.b16 %v1208, %v1208
          %1210 = vrot.lane.b32.xlu0 %v1209, 24
          %v1211 = vpop.permute.xlu0 %1210
          %vm1213 = vcmask 257216
          %1214 = vst.msk [vmem:[#allocation6] sm:$0xf] %vm1213, %v1211
          %v1215 = vld [vmem:[#allocation6] sm:$0xf]
          %v1216 = vld [vmem:[%s5] sm:$0xf]
          %v1217 = vld [vmem:[%s5 + $0x4] sm:$0xf]
          %v1218 = vld [vmem:[%s5 + $0x8] sm:$0xf]
          %v1219 = vld [vmem:[%s5 + $0xc] sm:$0xf]
          %v1220 = vld [vmem:[%s6] sm:$0x1]
          %v1222 = vlaneseq
          %v1223 = vshrl.u32 %v1222, 7
          %v1224 = vsub.s32 0, %v1223
          %v1225 = vrot.slane %v1220, %v1224
          %v1231 = vunpack.c.l.b16 %v1216
          %v1232 = vunpack.c.l.b16 %v1217
          %v1233 = vunpack.c.l.b16 %v1218
          %v1234 = vunpack.c.l.b16 %v1219
          %v1235 = vpack.c.b16 %v1232, %v1231
          %v1236 = vpack.c.b16 %v1234, %v1233
          %v1240 = vsel %vm518, %v1215, 0
          %1242 = vmatprep.subr.bf16.mxu0 0
          %1243 = vmatpush1.bf16.msra.mxu0 %v1235
          %1244 = vmatprep.subr.bf16.mxu0 0
          %1245 = vmatpush1.bf16.msra.mxu0 %v1236
          %1246 = vmatprep.subr.bf16.mxu0 0
          %1247 = vmatpush1.bf16.msra.mxu0 0
          %1248 = vmatprep.subr.bf16.mxu0 0
          %1249 = vmatpush1.bf16.msra.mxu0 0
          %1250 = vmatprep.subr.bf16.mxu0 0
          %1251 = vmatpush1.bf16.msra.mxu0 0
          %1252 = vmatprep.subr.bf16.mxu0 0
          %1253 = vmatpush1.bf16.msra.mxu0 0
          %1254 = vmatprep.subr.bf16.mxu0 0
          %1255 = vmatpush1.bf16.msra.mxu0 0
          %1256 = vmatprep.subr.bf16.mxu0 0
          %1257 = vmatpush1.bf16.msra.mxu0 0
          %1258 = vmatprep.subr.bf16.mxu0 0
          %1259 = vmatpush1.bf16.msra.mxu0 0
          %1260 = vmatprep.subr.bf16.mxu0 0
          %1261 = vmatpush1.bf16.msra.mxu0 0
          %1262 = vmatprep.subr.bf16.mxu0 0
          %1263 = vmatpush1.bf16.msra.mxu0 0
          %1264 = vmatprep.subr.bf16.mxu0 0
          %1265 = vmatpush1.bf16.msra.mxu0 0
          %1266 = vmatprep.subr.bf16.mxu0 0
          %1267 = vmatpush1.bf16.msra.mxu0 0
          %1268 = vmatprep.subr.bf16.mxu0 0
          %1269 = vmatpush1.bf16.msra.mxu0 0
          %1270 = vmatprep.subr.bf16.mxu0 0
          %1271 = vmatpush1.bf16.msra.mxu0 0
          %1272 = vmatprep.subr.bf16.mxu0 0
          %1273 = vmatpush1.bf16.msra.mxu0 0
          %1274 = vmatprep.mubr.bf16.mxu0 0
          %1275 = vmatmul.mubr.bf16.gmra.mrb[0].mxu0 %v1240
          %v1276 = vpop.f32.mrb[0].mxu0
          %v1277 = vadd.f32 %v1225, %v1276
          %v1278 = vpop.f32.mrb[0].mxu0
          %v1279 = vpop.f32.mrb[0].mxu0
          %v1280 = vpop.f32.mrb[0].mxu0
          %1281 = vdwg.mxu0
          %1282 = vst.msk [vmem:[%s402] sm:$0xff] %vm518, %v1277
        $region76: #{tpu_custom_call.1} parent=47 // pred_fallthru
          _
        %s1283 = sand.u32 %s218, 1
        %s1284 = scalar_lea.sflag [#allocation9], %s1283
        %s1285 = sand.u32 %s218, 1
        %s1286 = smul.addr %s1285, 8
        %s1287 = scalar_lea.vmem [#allocation16], %s1286
        // Predicated region
        $region77: #{tpu_custom_call.1} parent=47 // pred_check
          %p1288 = pneg %p228
        $region78: #{tpu_custom_call.1} parent=47 // pred_check_branch
          %1290 = sbr.rel (%p1288) target = $region80
        $region79: #{tpu_custom_call.1} parent=47 // pred_region
          %s1292 = ssub.s32 128, 128
          %1293 = vsyncadd %s1284, %s1292
          %s1294 = smul.addr %s33, 2
          %s1295 = sadd.s32 %s34, %s1294
          %s1296 = smul.addr %s1295, 128
          %s1297 = scalar_lea.hbm %s7, %s1296
          %s1299 = sshll.u32 %s1287, 4
          %s1300 = int_to_ptr.vmem [resolvable:$true] %s1299
          %1302 = dma.vmem_to_hbm [thread:$0]  %s1300, 128, %s1297, %s1284
        $region80: #{tpu_custom_call.1} parent=47 // pred_fallthru
          _
      $region48: #{tpu_custom_call.1} parent=5 // pred_fallthru
        _
      %p1303 = scmp.le.s32.totalorder 2, %s23
      // Predicated region
      $region81: #{tpu_custom_call.1} parent=5 // pred_check
        %p1304 = pneg %p1303
      $region82: #{tpu_custom_call.1} parent=5 // pred_check_branch
        %1306 = sbr.rel (%p1304) target = $region84
      $region83: #{tpu_custom_call.1} parent=5 // pred_region
        %s1307 = ssub.s32 %s23, 2
        // Predicated region
        $region85: #{tpu_custom_call.1} parent=83 // pred_check
          %p1308 = pneg %p234
        $region86: #{tpu_custom_call.1} parent=83 // pred_check_branch
          %1310 = sbr.rel (%p1308) target = $region88
        $region87: #{tpu_custom_call.1} parent=83 // pred_region
          %s1311 = sand.u32 %s219, 1
          %s1312 = scalar_lea.sflag [#allocation9], %s1311
          %s1313 = sand.u32 %s219, 1
          %s1314 = smul.addr %s1313, 8
          %s1315 = scalar_lea.vmem [#allocation16], %s1314
          %1316 = dma.done %s1312, 128
        $region88: #{tpu_custom_call.1} parent=83 // pred_fallthru
          _
      $region84: #{tpu_custom_call.1} parent=5 // pred_fallthru
        _
    $region6: #{tpu_custom_call.1} parent=1 // loop_footer
      %s27 = sadd.s32 1, %s23
    $region7: #{tpu_custom_call.1} parent=1 // loop_footer_branch
      %22 = sbr.rel target = $region3
    $region8: #{tpu_custom_call.1} parent=1 // loop_exit
      _
    %1317 = vsyncpa [#allocation8], 1
    %s1318 = scalar_lea.sflag [#allocation8], 1
    %1319 = vsyncpa %s1318, 1
    %1320 = vsyncpa [#allocation11], 1
    %s1321 = scalar_lea.sflag [#allocation11], 1
    %1322 = vsyncpa %s1321, 1
    %1323 = vsyncpa [#allocation14], 1
    %1324 = vsyncpa [#allocation9], 1
    %s1325 = scalar_lea.sflag [#allocation9], 1
    %1326 = vsyncpa %s1325, 1

</llo_original>
